<compile_context>
chip_gen: v6e
topology: v6e:2x2x1
jax: 0.10.0
libtpu: 0.0.40
codegen_flags: <defaults>
</compile_context>

<pallas_src>
import math

import jax
import jax.numpy as jnp
from jax.experimental import pallas as pl
from jax.experimental import pallas as pl  # noqa: F811 (kept single import path)
from jax.experimental.pallas import tpu as pltpu  # noqa: F401  (not needed: no grid/DMA)


MAX_STEP_NUM = 3


# ----------------------------------------------------------------------------
# Fused Pallas kernel: the entire RA_Decoder forward
# ----------------------------------------------------------------------------
def _ra_decoder_kernel(
    text2d_ref, img2d_ref, bias_ti_ref, bias_step_ref, h0_ref,
    ai_wq_ref, ai_bq_ref, ai_wkv_ref, ai_bkv_ref, ai_wo_ref, ai_bo_ref,
    a_wq_ref, a_bq_ref, a_wkv_ref, a_bkv_ref, a_wo_ref, a_bo_ref,
    tig_wih_ref, tig_whh_ref, tig_bx_ref, tig_bhhn_ref,
    st_wih_ref, st_whh_ref, st_bx_ref, st_bhhn_ref,
    out_ref,
):
    """Whole RA_Decoder forward; all activations/weights stay VMEM-resident.

    text2d: (B*Lt, H), img2d: (B*Li, H)   batch-flattened f32 features.
    bias_ti:   (B*Lt, B*Li)  block-diag additive bias (key-padding + cross-batch -1e30).
    bias_step: (B,    B*Lt)  same, for the 1-query-per-batch step attention.
    h0: (NL, B, H) initial hidden states.
    MHA weights pre-transposed; wq/bq pre-scaled by 1/sqrt(H); K/V fused (H, 2H).
    GRU weights fused per cell: wih (Din, 3H), whh (H, 3H), gates r|z|n on lanes;
    bx = [bih_r+bhh_r | bih_z+bhh_z | bih_n], bhhn = bhh_n (kept separate for r gating).
    out: (S*B, H) step-major stack of last-layer hidden states.
    """
    H = text2d_ref.shape[1]
    NL = h0_ref.shape[0]
    B = h0_ref.shape[1]
    S = st_wih_ref.shape[0] // NL

    f32 = jnp.float32
    bf16 = jnp.bfloat16

    def mm(a, b):
        # bf16 MXU operands, f32 accumulation (weights are already bf16).
        return jnp.dot(a.astype(bf16), b, preferred_element_type=f32)

    def attend_ctx(qp, kp_bf, vp_bf, bias, wo, bo):
        # Block-diagonal masked attention: one score matmul over all batches.
        s = jax.lax.dot_general(qp.astype(bf16), kp_bf, (((1,), (1,)), ((), ())),
                                preferred_element_type=f32) + bias
        m = jnp.max(s, axis=-1, keepdims=True)
        e = jnp.exp(s - m)
        p = e * pl.reciprocal(jnp.sum(e, axis=-1, keepdims=True), approx=True)
        ctx = mm(p, vp_bf)
        return mm(ctx, wo) + bo

    def gru(x, h, wih, whh, bx, bhhn):
        # torch.nn.GRUCell semantics; fused gate matmuls (r|z|n along lanes).
        gx = mm(x, wih) + bx          # (N, 3H)
        gh = mm(h, whh)               # (N, 3H)
        rz = jax.nn.sigmoid(gx[:, :2 * H] + gh[:, :2 * H])
        r = rz[:, :H]
        z = rz[:, H:]
        n = jnp.tanh(gx[:, 2 * H:] + r * (gh[:, 2 * H:] + bhhn))
        return (1.0 - z) * n + z * h

    text2d = text2d_ref[...]
    img2d = img2d_ref[...]

    # ---- Stage 1: text -> img cross-attention fused with token-wise text_img GRU ----
    qp = mm(text2d, ai_wq_ref[...]) + ai_bq_ref[...]            # wq/bq pre-scaled by 1/sqrt(H)
    kvp = mm(img2d, ai_wkv_ref[...]) + ai_bkv_ref[...]          # fused K/V projection
    kp = kvp[:, :H].astype(bf16)
    vp = kvp[:, H:].astype(bf16)
    attn_img = attend_ctx(qp, kp, vp, bias_ti_ref[...],
                          ai_wo_ref[...], ai_bo_ref[...])       # (B*Lt, H)

    tif2d = gru(attn_img, text2d, tig_wih_ref[...], tig_whh_ref[...],
                tig_bx_ref[...], tig_bhhn_ref[...])             # (B*Lt, H), f32

    # ---- Hoisted loop-invariant K/V projection for the 3-step decode loop ----
    kvp_s = mm(tif2d, a_wkv_ref[...]) + a_bkv_ref[...]
    kp_s = kvp_s[:, :H].astype(bf16)
    vp_s = kvp_s[:, H:].astype(bf16)

    a_wq = a_wq_ref[...]
    a_bq = a_bq_ref[...]
    a_wo = a_wo_ref[...]
    a_bo = a_bo_ref[...]
    bias_step = bias_step_ref[...]

    # ---- Stage 2: 3-step decode; hidden state stays resident in vregs ----
    h = [h0_ref[l] for l in range(NL)]
    for step in range(S):
        q = h[NL - 1]                                           # (B, H): one query per batch elem
        qp_s = mm(q, a_wq) + a_bq
        x = attend_ctx(qp_s, kp_s, vp_s, bias_step, a_wo, a_bo)  # (B, H)
        for layer in range(NL):
            idx = step * NL + layer
            hi = gru(x, h[layer], st_wih_ref[idx], st_whh_ref[idx],
                     st_bx_ref[idx], st_bhhn_ref[idx])
            # TODO(synk): StackedGRU inter-layer nn.Dropout treated as identity (eval
            # semantics); with num_layer=1 it is never applied anyway.
            x = hi
            h[layer] = hi
        out_ref[step * B:(step + 1) * B, :] = x.astype(out_ref.dtype)  # direct per-step store


# ----------------------------------------------------------------------------
# Pallas wrapper (jit'ed in main): one pallas_call per forward
# ----------------------------------------------------------------------------
def ra_decoder_forward_pallas(params, text_feature, text_mask, img_feature, img_mask, h0_s):
    B, Lt, H = text_feature.shape
    Li = img_feature.shape[1]
    NL = h0_s.shape[0]
    S = MAX_STEP_NUM

    f32 = jnp.float32
    bf16 = jnp.bfloat16
    neg = f32(-1e30)
    scale = f32(1.0 / math.sqrt(H))

    text2d = text_feature.reshape(B * Lt, H).astype(f32)
    img2d = img_feature.reshape(B * Li, H).astype(f32)

    text_bias = jnp.where(text_mask == 1, 0.0, neg).astype(f32)   # (B, Lt)
    img_bias = jnp.where(img_mask == 1, 0.0, neg).astype(f32)     # (B, Li)

    def blockdiag_bias(key_bias, lq):
        # (B, Lk) key-padding bias -> (B*lq, B*Lk) block-diagonal additive bias.
        Bb, Lk = key_bias.shape
        row_b = jnp.repeat(jnp.arange(Bb), lq)
        col_b = jnp.repeat(jnp.arange(Bb), Lk)
        same = row_b[:, None] == col_b[None, :]
        return jnp.where(same, key_bias.reshape(1, Bb * Lk), neg).astype(f32)

    bias_ti = blockdiag_bias(img_bias, Lt)     # (B*Lt, B*Li)
    bias_step = blockdiag_bias(text_bias, 1)   # (B,    B*Lt)

    def prep_mha(p):
        # Fold 1/sqrt(H) into wq/bq; pre-cast weights to bf16 (biases stay f32).
        return (
            (p["wq_t"] * scale).astype(bf16), (p["bq"] * scale).astype(f32),
            p["wkv_t"].astype(bf16), p["bkv"].astype(f32),
            p["wo_t"].astype(bf16), p["bo"].astype(f32),
        )

    def prep_gru(p):
        wih = p["wih"].astype(bf16)            # (Din, 3H), gates r|z|n along lanes
        whh = p["whh"].astype(bf16)            # (H,   3H)
        bx = jnp.concatenate(
            [p["bih"][:, :2 * H] + p["bhh"][:, :2 * H], p["bih"][:, 2 * H:]], axis=1
        ).astype(f32)                          # (1, 3H)
        bhhn = p["bhh"][:, 2 * H:].astype(f32)  # (1, H)
        return wih, whh, bx, bhhn

    ai = prep_mha(params["attn_img"])
    at = prep_mha(params["attn"])
    tg = prep_gru(params["text_img_gru"])

    stp = params["steps"]
    preps = [prep_gru(stp[i][j]) for i in range(S) for j in range(NL)]
    st_wih = jnp.stack([p[0] for p in preps])
    st_whh = jnp.stack([p[1] for p in preps])
    st_bx = jnp.stack([p[2] for p in preps])
    st_bhhn = jnp.stack([p[3] for p in preps])

    out2d = pl.pallas_call(
        _ra_decoder_kernel,
        out_shape=jax.ShapeDtypeStruct((S * B, H), f32),
    )(text2d, img2d, bias_ti, bias_step, h0_s.astype(f32),
      *ai, *at, *tg, st_wih, st_whh, st_bx, st_bhhn)

    return out2d.reshape(S, B, H)


# ----------------------------------------------------------------------------
# Pure-JAX reference (same math / same param layout, used only for a check)
# ----------------------------------------------------------------------------
def ra_decoder_forward_ref(params, text_feature, text_mask, img_feature, img_mask, h0_s):
    B, Lt, H = text_feature.shape
    NL = h0_s.shape[0]
    scale = 1.0 / math.sqrt(H)
    neg = jnp.float32(-1e30)
    text_bias = jnp.where(text_mask == 1, 0.0, neg).astype(jnp.float32)
    img_bias = jnp.where(img_mask == 1, 0.0, neg).astype(jnp.float32)

    def attend(q, kv, bias, p):
        qp = (q @ p["wq_t"] + p["bq"]) * scale
        kvp = kv @ p["wkv_t"] + p["bkv"]
        kp, vp = kvp[..., :H], kvp[..., H:]
        s = jnp.einsum("bqh,bkh->bqk", qp, kp) + bias[:, None, :]
        w = jax.nn.softmax(s, axis=-1)
        return jnp.einsum("bqk,bkh->bqh", w, vp) @ p["wo_t"] + p["bo"]

    def gru(x, h, p):
        gx = x @ p["wih"] + p["bih"]
        gh = h @ p["whh"] + p["bhh"]
        r = jax.nn.sigmoid(gx[:, :H] + gh[:, :H])
        z = jax.nn.sigmoid(gx[:, H:2 * H] + gh[:, H:2 * H])
        n = jnp.tanh(gx[:, 2 * H:] + r * gh[:, 2 * H:])
        return (1.0 - z) * n + z * h

    attn_img = attend(text_feature, img_feature, img_bias, params["attn_img"])
    tif = gru(attn_img.reshape(-1, H), text_feature.reshape(-1, H),
              params["text_img_gru"]).reshape(B, Lt, H)

    h = [h0_s[l] for l in range(NL)]
    outs = []
    for step in range(MAX_STEP_NUM):
        q = h[NL - 1][:, None, :]
        x = attend(q, tif, text_bias, params["attn"])[:, 0, :]
        for layer in range(NL):
            hi = gru(x, h[layer], params["steps"][step][layer])
            x = hi
            h[layer] = hi
        outs.append(x)
    return jnp.stack(outs)


# ----------------------------------------------------------------------------
# Deterministic parameter init (shapes follow the PyTorch module __init__)
# ----------------------------------------------------------------------------
def _uniform(key, shape, scale):
    return jax.random.uniform(key, shape, jnp.float32, -scale, scale)


def init_mha_params(key, H):
    ks = jax.random.split(key, 6)
    s = 1.0 / math.sqrt(H)
    return dict(
        wq_t=_uniform(ks[0], (H, H), s),
        wkv_t=_uniform(ks[1], (H, 2 * H), s),   # fused K/V projection (pre-transposed)
        wo_t=_uniform(ks[2], (H, H), s),
        bq=_uniform(ks[3], (1, H), s),
        bkv=_uniform(ks[4], (1, 2 * H), s),
        bo=_uniform(ks[5], (1, H), s),
    )


def init_gru_params(key, Din, H):
    ks = jax.random.split(key, 4)
    s = 1.0 / math.sqrt(H)
    return dict(
        wih=_uniform(ks[0], (Din, 3 * H), s),   # gates (r|z|n) contiguous along lanes
        whh=_uniform(ks[1], (H, 3 * H), s),
        bih=_uniform(ks[2], (1, 3 * H), s),
        bhh=_uniform(ks[3], (1, 3 * H), s),
    )


def init_params(key, H, num_layers):
    k_img, k_txt, k_tig, k_steps = jax.random.split(key, 4)
    step_keys = jax.random.split(k_steps, MAX_STEP_NUM * num_layers)
    steps = []
    idx = 0
    for _ in range(MAX_STEP_NUM):
        layers = []
        for _ in range(num_layers):
            layers.append(init_gru_params(step_keys[idx], H, H))
            idx += 1
        steps.append(layers)
    return dict(
        attn_img=init_mha_params(k_img, H),
        attn=init_mha_params(k_txt, H),
        text_img_gru=init_gru_params(k_tig, H, H),
        steps=steps,
    )


# ----------------------------------------------------------------------------
# Main
# ----------------------------------------------------------------------------
if __name__ == "__main__":
    B, Lt, Li, H, NUM_LAYERS = 2, 8, 6, 32, 1

    key = jax.random.PRNGKey(0)
    k_text, k_img, k_h0, k_param = jax.random.split(key, 4)

    text_feature = jax.random.normal(k_text, (B, Lt, H), jnp.float32)
    img_feature = jax.random.normal(k_img, (B, Li, H), jnp.float32)
    text_mask = jnp.array([[1] * Lt, [1] * (Lt - 2) + [0] * 2], jnp.float32)
    img_mask = jnp.array([[1] * Li, [1] * (Li - 2) + [0] * 2], jnp.float32)
    h0_s = jax.random.normal(k_h0, (NUM_LAYERS, B, H), jnp.float32)

    params = init_params(k_param, H, NUM_LAYERS)

    fwd = jax.jit(ra_decoder_forward_pallas)
    out = jax.block_until_ready(
        fwd(params, text_feature, text_mask, img_feature, img_mask, h0_s))

    assert out.shape == (MAX_STEP_NUM, B, H), out.shape
    assert bool(jnp.all(jnp.isfinite(out)))

    # Sanity check against a pure-f32 JAX reference of the same math.
    # Kernel uses bf16 MXU operands (f32 accumulate) + approx softmax reciprocal,
    # so tolerance is 3e-2 (structural bugs would show errors >> 0.1).
    with jax.default_matmul_precision("float32"):
        ref = ra_decoder_forward_ref(params, text_feature, text_mask, img_feature,
                                     img_mask, h0_s)
    max_err = float(jnp.max(jnp.abs(out - ref)))
    assert max_err < 3e-2, max_err

    print("KERNEL_OK")
</pallas_src>

<mosaic_0001>
module attributes {stable_mosaic.version = 11 : i64} {
  func.func @_ra_decoder_kernel(%arg0: memref<16x32xf32, #tpu.memory_space<vmem>>, %arg1: memref<12x32xf32, #tpu.memory_space<vmem>>, %arg2: memref<16x12xf32, #tpu.memory_space<vmem>>, %arg3: memref<2x16xf32, #tpu.memory_space<vmem>>, %arg4: memref<1x2x32xf32, #tpu.memory_space<vmem>>, %arg5: memref<32x32xbf16, #tpu.memory_space<vmem>>, %arg6: memref<1x32xf32, #tpu.memory_space<vmem>>, %arg7: memref<32x64xbf16, #tpu.memory_space<vmem>>, %arg8: memref<1x64xf32, #tpu.memory_space<vmem>>, %arg9: memref<32x32xbf16, #tpu.memory_space<vmem>>, %arg10: memref<1x32xf32, #tpu.memory_space<vmem>>, %arg11: memref<32x32xbf16, #tpu.memory_space<vmem>>, %arg12: memref<1x32xf32, #tpu.memory_space<vmem>>, %arg13: memref<32x64xbf16, #tpu.memory_space<vmem>>, %arg14: memref<1x64xf32, #tpu.memory_space<vmem>>, %arg15: memref<32x32xbf16, #tpu.memory_space<vmem>>, %arg16: memref<1x32xf32, #tpu.memory_space<vmem>>, %arg17: memref<32x96xbf16, #tpu.memory_space<vmem>>, %arg18: memref<32x96xbf16, #tpu.memory_space<vmem>>, %arg19: memref<1x96xf32, #tpu.memory_space<vmem>>, %arg20: memref<1x32xf32, #tpu.memory_space<vmem>>, %arg21: memref<3x32x96xbf16, #tpu.memory_space<vmem>>, %arg22: memref<3x32x96xbf16, #tpu.memory_space<vmem>>, %arg23: memref<3x1x96xf32, #tpu.memory_space<vmem>>, %arg24: memref<3x1x32xf32, #tpu.memory_space<vmem>>, %arg25: memref<6x32xf32, #tpu.memory_space<vmem>>) attributes {dimension_semantics = [], scalar_prefetch = 0 : i64, scratch_operands = 0 : i64, tpu.core_type = #tpu.core_type<tc>} {
    %c0 = arith.constant 0 : index
    %c0_0 = arith.constant 0 : index
    %0 = vector.load %arg0[%c0, %c0_0] : memref<16x32xf32, #tpu.memory_space<vmem>>, vector<16x32xf32>
    %c0_1 = arith.constant 0 : index
    %c0_2 = arith.constant 0 : index
    %1 = vector.load %arg1[%c0_1, %c0_2] : memref<12x32xf32, #tpu.memory_space<vmem>>, vector<12x32xf32>
    %c0_3 = arith.constant 0 : index
    %c0_4 = arith.constant 0 : index
    %2 = vector.load %arg5[%c0_3, %c0_4] : memref<32x32xbf16, #tpu.memory_space<vmem>>, vector<32x32xbf16>
    %3 = arith.truncf %0 : vector<16x32xf32> to vector<16x32xbf16>
    %cst = arith.constant dense<0.000000e+00> : vector<16x32xf32>
    %4 = tpu.matmul %3, %2, %cst {dimension_numbers = #tpu.dot_dimension_numbers<[1], [0], [0], [1], [0, 0, 1, 1], [], []>} : vector<16x32xbf16>, vector<32x32xbf16>, vector<16x32xf32> -> vector<16x32xf32>
    %c0_5 = arith.constant 0 : index
    %c0_6 = arith.constant 0 : index
    %5 = vector.load %arg6[%c0_5, %c0_6] : memref<1x32xf32, #tpu.memory_space<vmem>>, vector<1x32xf32>
    %6 = vector.broadcast %5 : vector<1x32xf32> to vector<16x32xf32>
    %7 = arith.addf %4, %6 : vector<16x32xf32>
    %c0_7 = arith.constant 0 : index
    %c0_8 = arith.constant 0 : index
    %8 = vector.load %arg7[%c0_7, %c0_8] : memref<32x64xbf16, #tpu.memory_space<vmem>>, vector<32x64xbf16>
    %9 = arith.truncf %1 : vector<12x32xf32> to vector<12x32xbf16>
    %cst_9 = arith.constant dense<0.000000e+00> : vector<12x64xf32>
    %10 = tpu.matmul %9, %8, %cst_9 {dimension_numbers = #tpu.dot_dimension_numbers<[1], [0], [0], [1], [0, 0, 1, 1], [], []>} : vector<12x32xbf16>, vector<32x64xbf16>, vector<12x64xf32> -> vector<12x64xf32>
    %c0_10 = arith.constant 0 : index
    %c0_11 = arith.constant 0 : index
    %11 = vector.load %arg8[%c0_10, %c0_11] : memref<1x64xf32, #tpu.memory_space<vmem>>, vector<1x64xf32>
    %12 = vector.broadcast %11 : vector<1x64xf32> to vector<12x64xf32>
    %13 = arith.addf %10, %12 : vector<12x64xf32>
    %14 = vector.extract_strided_slice %13 {offsets = [0, 0], sizes = [12, 32], strides = [1, 1]} : vector<12x64xf32> to vector<12x32xf32>
    %15 = arith.truncf %14 : vector<12x32xf32> to vector<12x32xbf16>
    %16 = vector.extract_strided_slice %13 {offsets = [0, 32], sizes = [12, 32], strides = [1, 1]} : vector<12x64xf32> to vector<12x32xf32>
    %17 = arith.truncf %16 : vector<12x32xf32> to vector<12x32xbf16>
    %c0_12 = arith.constant 0 : index
    %c0_13 = arith.constant 0 : index
    %18 = vector.load %arg2[%c0_12, %c0_13] : memref<16x12xf32, #tpu.memory_space<vmem>>, vector<16x12xf32>
    %c0_14 = arith.constant 0 : index
    %c0_15 = arith.constant 0 : index
    %19 = vector.load %arg9[%c0_14, %c0_15] : memref<32x32xbf16, #tpu.memory_space<vmem>>, vector<32x32xbf16>
    %c0_16 = arith.constant 0 : index
    %c0_17 = arith.constant 0 : index
    %20 = vector.load %arg10[%c0_16, %c0_17] : memref<1x32xf32, #tpu.memory_space<vmem>>, vector<1x32xf32>
    %21 = arith.truncf %7 : vector<16x32xf32> to vector<16x32xbf16>
    %cst_18 = arith.constant dense<0.000000e+00> : vector<16x12xf32>
    %22 = tpu.matmul %21, %15, %cst_18 {dimension_numbers = #tpu.dot_dimension_numbers<[1], [1], [0], [0], [0, 0, 1, 0], [], []>} : vector<16x32xbf16>, vector<12x32xbf16>, vector<16x12xf32> -> vector<16x12xf32>
    %23 = arith.addf %22, %18 : vector<16x12xf32>
    %cst_19 = arith.constant dense<0xFF800000> : vector<16xf32>
    %24 = vector.multi_reduction <maximumf>, %23, %cst_19 [1] : vector<16x12xf32> to vector<16xf32>
    %25 = vector.shape_cast %24 : vector<16xf32> to vector<16x1xf32>
    %26 = vector.broadcast %25 : vector<16x1xf32> to vector<16x12xf32>
    %27 = arith.subf %23, %26 : vector<16x12xf32>
    %28 = math.exp %27 : vector<16x12xf32>
    %cst_20 = arith.constant dense<0.000000e+00> : vector<16xf32>
    %29 = vector.multi_reduction <add>, %28, %cst_20 [1] : vector<16x12xf32> to vector<16xf32>
    %30 = vector.shape_cast %29 : vector<16xf32> to vector<16x1xf32>
    %31 = tpu.reciprocal %30 {approx = true} : vector<16x1xf32> -> vector<16x1xf32>
    %32 = vector.broadcast %31 : vector<16x1xf32> to vector<16x12xf32>
    %33 = arith.mulf %28, %32 : vector<16x12xf32>
    %34 = arith.truncf %33 : vector<16x12xf32> to vector<16x12xbf16>
    %cst_21 = arith.constant dense<0.000000e+00> : vector<16x32xf32>
    %35 = tpu.matmul %34, %17, %cst_21 {dimension_numbers = #tpu.dot_dimension_numbers<[1], [0], [0], [1], [0, 0, 1, 1], [], []>} : vector<16x12xbf16>, vector<12x32xbf16>, vector<16x32xf32> -> vector<16x32xf32>
    %36 = arith.truncf %35 : vector<16x32xf32> to vector<16x32xbf16>
    %cst_22 = arith.constant dense<0.000000e+00> : vector<16x32xf32>
    %37 = tpu.matmul %36, %19, %cst_22 {dimension_numbers = #tpu.dot_dimension_numbers<[1], [0], [0], [1], [0, 0, 1, 1], [], []>} : vector<16x32xbf16>, vector<32x32xbf16>, vector<16x32xf32> -> vector<16x32xf32>
    %38 = vector.broadcast %20 : vector<1x32xf32> to vector<16x32xf32>
    %39 = arith.addf %37, %38 : vector<16x32xf32>
    %c0_23 = arith.constant 0 : index
    %c0_24 = arith.constant 0 : index
    %40 = vector.load %arg17[%c0_23, %c0_24] : memref<32x96xbf16, #tpu.memory_space<vmem>>, vector<32x96xbf16>
    %c0_25 = arith.constant 0 : index
    %c0_26 = arith.constant 0 : index
    %41 = vector.load %arg18[%c0_25, %c0_26] : memref<32x96xbf16, #tpu.memory_space<vmem>>, vector<32x96xbf16>
    %c0_27 = arith.constant 0 : index
    %c0_28 = arith.constant 0 : index
    %42 = vector.load %arg19[%c0_27, %c0_28] : memref<1x96xf32, #tpu.memory_space<vmem>>, vector<1x96xf32>
    %c0_29 = arith.constant 0 : index
    %c0_30 = arith.constant 0 : index
    %43 = vector.load %arg20[%c0_29, %c0_30] : memref<1x32xf32, #tpu.memory_space<vmem>>, vector<1x32xf32>
    %44 = arith.truncf %39 : vector<16x32xf32> to vector<16x32xbf16>
    %cst_31 = arith.constant dense<0.000000e+00> : vector<16x96xf32>
    %45 = tpu.matmul %44, %40, %cst_31 {dimension_numbers = #tpu.dot_dimension_numbers<[1], [0], [0], [1], [0, 0, 1, 1], [], []>} : vector<16x32xbf16>, vector<32x96xbf16>, vector<16x96xf32> -> vector<16x96xf32>
    %46 = vector.broadcast %42 : vector<1x96xf32> to vector<16x96xf32>
    %47 = arith.addf %45, %46 : vector<16x96xf32>
    %48 = arith.truncf %0 : vector<16x32xf32> to vector<16x32xbf16>
    %cst_32 = arith.constant dense<0.000000e+00> : vector<16x96xf32>
    %49 = tpu.matmul %48, %41, %cst_32 {dimension_numbers = #tpu.dot_dimension_numbers<[1], [0], [0], [1], [0, 0, 1, 1], [], []>} : vector<16x32xbf16>, vector<32x96xbf16>, vector<16x96xf32> -> vector<16x96xf32>
    %50 = vector.extract_strided_slice %47 {offsets = [0, 0], sizes = [16, 64], strides = [1, 1]} : vector<16x96xf32> to vector<16x64xf32>
    %51 = vector.extract_strided_slice %49 {offsets = [0, 0], sizes = [16, 64], strides = [1, 1]} : vector<16x96xf32> to vector<16x64xf32>
    %52 = arith.addf %50, %51 : vector<16x64xf32>
    %53 = arith.negf %52 : vector<16x64xf32>
    %54 = math.exp %53 : vector<16x64xf32>
    %cst_33 = arith.constant 1.000000e+00 : f32
    %55 = vector.broadcast %cst_33 : f32 to vector<16x64xf32>
    %56 = arith.addf %55, %54 : vector<16x64xf32>
    %57 = arith.divf %55, %56 : vector<16x64xf32>
    %58 = vector.extract_strided_slice %57 {offsets = [0, 0], sizes = [16, 32], strides = [1, 1]} : vector<16x64xf32> to vector<16x32xf32>
    %59 = vector.extract_strided_slice %57 {offsets = [0, 32], sizes = [16, 32], strides = [1, 1]} : vector<16x64xf32> to vector<16x32xf32>
    %60 = vector.extract_strided_slice %47 {offsets = [0, 64], sizes = [16, 32], strides = [1, 1]} : vector<16x96xf32> to vector<16x32xf32>
    %61 = vector.extract_strided_slice %49 {offsets = [0, 64], sizes = [16, 32], strides = [1, 1]} : vector<16x96xf32> to vector<16x32xf32>
    %62 = vector.broadcast %43 : vector<1x32xf32> to vector<16x32xf32>
    %63 = arith.addf %61, %62 : vector<16x32xf32>
    %64 = arith.mulf %58, %63 : vector<16x32xf32>
    %65 = arith.addf %60, %64 : vector<16x32xf32>
    %66 = math.tanh %65 : vector<16x32xf32>
    %cst_34 = arith.constant 1.000000e+00 : f32
    %67 = vector.broadcast %cst_34 : f32 to vector<16x32xf32>
    %68 = arith.subf %67, %59 : vector<16x32xf32>
    %69 = arith.mulf %68, %66 : vector<16x32xf32>
    %70 = arith.mulf %59, %0 : vector<16x32xf32>
    %71 = arith.addf %69, %70 : vector<16x32xf32>
    %c0_35 = arith.constant 0 : index
    %c0_36 = arith.constant 0 : index
    %72 = vector.load %arg13[%c0_35, %c0_36] : memref<32x64xbf16, #tpu.memory_space<vmem>>, vector<32x64xbf16>
    %73 = arith.truncf %71 : vector<16x32xf32> to vector<16x32xbf16>
    %cst_37 = arith.constant dense<0.000000e+00> : vector<16x64xf32>
    %74 = tpu.matmul %73, %72, %cst_37 {dimension_numbers = #tpu.dot_dimension_numbers<[1], [0], [0], [1], [0, 0, 1, 1], [], []>} : vector<16x32xbf16>, vector<32x64xbf16>, vector<16x64xf32> -> vector<16x64xf32>
    %c0_38 = arith.constant 0 : index
    %c0_39 = arith.constant 0 : index
    %75 = vector.load %arg14[%c0_38, %c0_39] : memref<1x64xf32, #tpu.memory_space<vmem>>, vector<1x64xf32>
    %76 = vector.broadcast %75 : vector<1x64xf32> to vector<16x64xf32>
    %77 = arith.addf %74, %76 : vector<16x64xf32>
    %78 = vector.extract_strided_slice %77 {offsets = [0, 0], sizes = [16, 32], strides = [1, 1]} : vector<16x64xf32> to vector<16x32xf32>
    %79 = arith.truncf %78 : vector<16x32xf32> to vector<16x32xbf16>
    %80 = vector.extract_strided_slice %77 {offsets = [0, 32], sizes = [16, 32], strides = [1, 1]} : vector<16x64xf32> to vector<16x32xf32>
    %81 = arith.truncf %80 : vector<16x32xf32> to vector<16x32xbf16>
    %c0_40 = arith.constant 0 : index
    %c0_41 = arith.constant 0 : index
    %82 = vector.load %arg11[%c0_40, %c0_41] : memref<32x32xbf16, #tpu.memory_space<vmem>>, vector<32x32xbf16>
    %c0_42 = arith.constant 0 : index
    %c0_43 = arith.constant 0 : index
    %83 = vector.load %arg12[%c0_42, %c0_43] : memref<1x32xf32, #tpu.memory_space<vmem>>, vector<1x32xf32>
    %c0_44 = arith.constant 0 : index
    %c0_45 = arith.constant 0 : index
    %84 = vector.load %arg15[%c0_44, %c0_45] : memref<32x32xbf16, #tpu.memory_space<vmem>>, vector<32x32xbf16>
    %c0_46 = arith.constant 0 : index
    %c0_47 = arith.constant 0 : index
    %85 = vector.load %arg16[%c0_46, %c0_47] : memref<1x32xf32, #tpu.memory_space<vmem>>, vector<1x32xf32>
    %c0_48 = arith.constant 0 : index
    %c0_49 = arith.constant 0 : index
    %86 = vector.load %arg3[%c0_48, %c0_49] : memref<2x16xf32, #tpu.memory_space<vmem>>, vector<2x16xf32>
    %c0_50 = arith.constant 0 : index
    %c0_51 = arith.constant 0 : index
    %c0_52 = arith.constant 0 : index
    %87 = vector.load %arg4[%c0_50, %c0_51, %c0_52] : memref<1x2x32xf32, #tpu.memory_space<vmem>>, vector<1x2x32xf32>
    %88 = vector.shape_cast %87 : vector<1x2x32xf32> to vector<2x32xf32>
    %89 = arith.truncf %88 : vector<2x32xf32> to vector<2x32xbf16>
    %cst_53 = arith.constant dense<0.000000e+00> : vector<2x32xf32>
    %90 = tpu.matmul %89, %82, %cst_53 {dimension_numbers = #tpu.dot_dimension_numbers<[1], [0], [0], [1], [0, 0, 1, 1], [], []>} : vector<2x32xbf16>, vector<32x32xbf16>, vector<2x32xf32> -> vector<2x32xf32>
    %91 = vector.broadcast %83 : vector<1x32xf32> to vector<2x32xf32>
    %92 = arith.addf %90, %91 : vector<2x32xf32>
    %93 = arith.truncf %92 : vector<2x32xf32> to vector<2x32xbf16>
    %cst_54 = arith.constant dense<0.000000e+00> : vector<2x16xf32>
    %94 = tpu.matmul %93, %79, %cst_54 {dimension_numbers = #tpu.dot_dimension_numbers<[1], [1], [0], [0], [0, 0, 1, 0], [], []>} : vector<2x32xbf16>, vector<16x32xbf16>, vector<2x16xf32> -> vector<2x16xf32>
    %95 = arith.addf %94, %86 : vector<2x16xf32>
    %cst_55 = arith.constant dense<0xFF800000> : vector<2xf32>
    %96 = vector.multi_reduction <maximumf>, %95, %cst_55 [1] : vector<2x16xf32> to vector<2xf32>
    %97 = vector.shape_cast %96 : vector<2xf32> to vector<2x1xf32>
    %98 = vector.broadcast %97 : vector<2x1xf32> to vector<2x16xf32>
    %99 = arith.subf %95, %98 : vector<2x16xf32>
    %100 = math.exp %99 : vector<2x16xf32>
    %cst_56 = arith.constant dense<0.000000e+00> : vector<2xf32>
    %101 = vector.multi_reduction <add>, %100, %cst_56 [1] : vector<2x16xf32> to vector<2xf32>
    %102 = vector.shape_cast %101 : vector<2xf32> to vector<2x1xf32>
    %103 = tpu.reciprocal %102 {approx = true} : vector<2x1xf32> -> vector<2x1xf32>
    %104 = vector.broadcast %103 : vector<2x1xf32> to vector<2x16xf32>
    %105 = arith.mulf %100, %104 : vector<2x16xf32>
    %106 = arith.truncf %105 : vector<2x16xf32> to vector<2x16xbf16>
    %cst_57 = arith.constant dense<0.000000e+00> : vector<2x32xf32>
    %107 = tpu.matmul %106, %81, %cst_57 {dimension_numbers = #tpu.dot_dimension_numbers<[1], [0], [0], [1], [0, 0, 1, 1], [], []>} : vector<2x16xbf16>, vector<16x32xbf16>, vector<2x32xf32> -> vector<2x32xf32>
    %108 = arith.truncf %107 : vector<2x32xf32> to vector<2x32xbf16>
    %cst_58 = arith.constant dense<0.000000e+00> : vector<2x32xf32>
    %109 = tpu.matmul %108, %84, %cst_58 {dimension_numbers = #tpu.dot_dimension_numbers<[1], [0], [0], [1], [0, 0, 1, 1], [], []>} : vector<2x32xbf16>, vector<32x32xbf16>, vector<2x32xf32> -> vector<2x32xf32>
    %110 = vector.broadcast %85 : vector<1x32xf32> to vector<2x32xf32>
    %111 = arith.addf %109, %110 : vector<2x32xf32>
    %c0_59 = arith.constant 0 : index
    %c0_60 = arith.constant 0 : index
    %c0_61 = arith.constant 0 : index
    %112 = vector.load %arg21[%c0_59, %c0_60, %c0_61] : memref<3x32x96xbf16, #tpu.memory_space<vmem>>, vector<1x32x96xbf16>
    %113 = vector.shape_cast %112 : vector<1x32x96xbf16> to vector<32x96xbf16>
    %c0_62 = arith.constant 0 : index
    %c0_63 = arith.constant 0 : index
    %c0_64 = arith.constant 0 : index
    %114 = vector.load %arg22[%c0_62, %c0_63, %c0_64] : memref<3x32x96xbf16, #tpu.memory_space<vmem>>, vector<1x32x96xbf16>
    %115 = vector.shape_cast %114 : vector<1x32x96xbf16> to vector<32x96xbf16>
    %c0_65 = arith.constant 0 : index
    %c0_66 = arith.constant 0 : index
    %c0_67 = arith.constant 0 : index
    %116 = vector.load %arg23[%c0_65, %c0_66, %c0_67] : memref<3x1x96xf32, #tpu.memory_space<vmem>>, vector<1x1x96xf32>
    %117 = vector.shape_cast %116 : vector<1x1x96xf32> to vector<1x96xf32>
    %c0_68 = arith.constant 0 : index
    %c0_69 = arith.constant 0 : index
    %c0_70 = arith.constant 0 : index
    %118 = vector.load %arg24[%c0_68, %c0_69, %c0_70] : memref<3x1x32xf32, #tpu.memory_space<vmem>>, vector<1x1x32xf32>
    %119 = vector.shape_cast %118 : vector<1x1x32xf32> to vector<1x32xf32>
    %120 = arith.truncf %111 : vector<2x32xf32> to vector<2x32xbf16>
    %cst_71 = arith.constant dense<0.000000e+00> : vector<2x96xf32>
    %121 = tpu.matmul %120, %113, %cst_71 {dimension_numbers = #tpu.dot_dimension_numbers<[1], [0], [0], [1], [0, 0, 1, 1], [], []>} : vector<2x32xbf16>, vector<32x96xbf16>, vector<2x96xf32> -> vector<2x96xf32>
    %122 = vector.broadcast %117 : vector<1x96xf32> to vector<2x96xf32>
    %123 = arith.addf %121, %122 : vector<2x96xf32>
    %124 = arith.truncf %88 : vector<2x32xf32> to vector<2x32xbf16>
    %cst_72 = arith.constant dense<0.000000e+00> : vector<2x96xf32>
    %125 = tpu.matmul %124, %115, %cst_72 {dimension_numbers = #tpu.dot_dimension_numbers<[1], [0], [0], [1], [0, 0, 1, 1], [], []>} : vector<2x32xbf16>, vector<32x96xbf16>, vector<2x96xf32> -> vector<2x96xf32>
    %126 = vector.extract_strided_slice %123 {offsets = [0, 0], sizes = [2, 64], strides = [1, 1]} : vector<2x96xf32> to vector<2x64xf32>
    %127 = vector.extract_strided_slice %125 {offsets = [0, 0], sizes = [2, 64], strides = [1, 1]} : vector<2x96xf32> to vector<2x64xf32>
    %128 = arith.addf %126, %127 : vector<2x64xf32>
    %129 = arith.negf %128 : vector<2x64xf32>
    %130 = math.exp %129 : vector<2x64xf32>
    %cst_73 = arith.constant 1.000000e+00 : f32
    %131 = vector.broadcast %cst_73 : f32 to vector<2x64xf32>
    %132 = arith.addf %131, %130 : vector<2x64xf32>
    %133 = arith.divf %131, %132 : vector<2x64xf32>
    %134 = vector.extract_strided_slice %133 {offsets = [0, 0], sizes = [2, 32], strides = [1, 1]} : vector<2x64xf32> to vector<2x32xf32>
    %135 = vector.extract_strided_slice %133 {offsets = [0, 32], sizes = [2, 32], strides = [1, 1]} : vector<2x64xf32> to vector<2x32xf32>
    %136 = vector.extract_strided_slice %123 {offsets = [0, 64], sizes = [2, 32], strides = [1, 1]} : vector<2x96xf32> to vector<2x32xf32>
    %137 = vector.extract_strided_slice %125 {offsets = [0, 64], sizes = [2, 32], strides = [1, 1]} : vector<2x96xf32> to vector<2x32xf32>
    %138 = vector.broadcast %119 : vector<1x32xf32> to vector<2x32xf32>
    %139 = arith.addf %137, %138 : vector<2x32xf32>
    %140 = arith.mulf %134, %139 : vector<2x32xf32>
    %141 = arith.addf %136, %140 : vector<2x32xf32>
    %142 = math.tanh %141 : vector<2x32xf32>
    %cst_74 = arith.constant 1.000000e+00 : f32
    %143 = vector.broadcast %cst_74 : f32 to vector<2x32xf32>
    %144 = arith.subf %143, %135 : vector<2x32xf32>
    %145 = arith.mulf %144, %142 : vector<2x32xf32>
    %146 = arith.mulf %135, %88 : vector<2x32xf32>
    %147 = arith.addf %145, %146 : vector<2x32xf32>
    %c0_75 = arith.constant 0 : index
    %c0_76 = arith.constant 0 : index
    %148 = vector.load %arg25[%c0_75, %c0_76] : memref<6x32xf32, #tpu.memory_space<vmem>>, vector<2x32xf32>
    tpu.vector_store %arg25[%c0_75, %c0_76], %147 {strides = array<i32>} : memref<6x32xf32, #tpu.memory_space<vmem>>, vector<2x32xf32>,
    %149 = arith.truncf %147 : vector<2x32xf32> to vector<2x32xbf16>
    %cst_77 = arith.constant dense<0.000000e+00> : vector<2x32xf32>
    %150 = tpu.matmul %149, %82, %cst_77 {dimension_numbers = #tpu.dot_dimension_numbers<[1], [0], [0], [1], [0, 0, 1, 1], [], []>} : vector<2x32xbf16>, vector<32x32xbf16>, vector<2x32xf32> -> vector<2x32xf32>
    %151 = vector.broadcast %83 : vector<1x32xf32> to vector<2x32xf32>
    %152 = arith.addf %150, %151 : vector<2x32xf32>
    %153 = arith.truncf %152 : vector<2x32xf32> to vector<2x32xbf16>
    %cst_78 = arith.constant dense<0.000000e+00> : vector<2x16xf32>
    %154 = tpu.matmul %153, %79, %cst_78 {dimension_numbers = #tpu.dot_dimension_numbers<[1], [1], [0], [0], [0, 0, 1, 0], [], []>} : vector<2x32xbf16>, vector<16x32xbf16>, vector<2x16xf32> -> vector<2x16xf32>
    %155 = arith.addf %154, %86 : vector<2x16xf32>
    %cst_79 = arith.constant dense<0xFF800000> : vector<2xf32>
    %156 = vector.multi_reduction <maximumf>, %155, %cst_79 [1] : vector<2x16xf32> to vector<2xf32>
    %157 = vector.shape_cast %156 : vector<2xf32> to vector<2x1xf32>
    %158 = vector.broadcast %157 : vector<2x1xf32> to vector<2x16xf32>
    %159 = arith.subf %155, %158 : vector<2x16xf32>
    %160 = math.exp %159 : vector<2x16xf32>
    %cst_80 = arith.constant dense<0.000000e+00> : vector<2xf32>
    %161 = vector.multi_reduction <add>, %160, %cst_80 [1] : vector<2x16xf32> to vector<2xf32>
    %162 = vector.shape_cast %161 : vector<2xf32> to vector<2x1xf32>
    %163 = tpu.reciprocal %162 {approx = true} : vector<2x1xf32> -> vector<2x1xf32>
    %164 = vector.broadcast %163 : vector<2x1xf32> to vector<2x16xf32>
    %165 = arith.mulf %160, %164 : vector<2x16xf32>
    %166 = arith.truncf %165 : vector<2x16xf32> to vector<2x16xbf16>
    %cst_81 = arith.constant dense<0.000000e+00> : vector<2x32xf32>
    %167 = tpu.matmul %166, %81, %cst_81 {dimension_numbers = #tpu.dot_dimension_numbers<[1], [0], [0], [1], [0, 0, 1, 1], [], []>} : vector<2x16xbf16>, vector<16x32xbf16>, vector<2x32xf32> -> vector<2x32xf32>
    %168 = arith.truncf %167 : vector<2x32xf32> to vector<2x32xbf16>
    %cst_82 = arith.constant dense<0.000000e+00> : vector<2x32xf32>
    %169 = tpu.matmul %168, %84, %cst_82 {dimension_numbers = #tpu.dot_dimension_numbers<[1], [0], [0], [1], [0, 0, 1, 1], [], []>} : vector<2x32xbf16>, vector<32x32xbf16>, vector<2x32xf32> -> vector<2x32xf32>
    %170 = vector.broadcast %85 : vector<1x32xf32> to vector<2x32xf32>
    %171 = arith.addf %169, %170 : vector<2x32xf32>
    %c1 = arith.constant 1 : index
    %c0_83 = arith.constant 0 : index
    %c0_84 = arith.constant 0 : index
    %172 = vector.load %arg21[%c1, %c0_83, %c0_84] : memref<3x32x96xbf16, #tpu.memory_space<vmem>>, vector<1x32x96xbf16>
    %173 = vector.shape_cast %172 : vector<1x32x96xbf16> to vector<32x96xbf16>
    %c1_85 = arith.constant 1 : index
    %c0_86 = arith.constant 0 : index
    %c0_87 = arith.constant 0 : index
    %174 = vector.load %arg22[%c1_85, %c0_86, %c0_87] : memref<3x32x96xbf16, #tpu.memory_space<vmem>>, vector<1x32x96xbf16>
    %175 = vector.shape_cast %174 : vector<1x32x96xbf16> to vector<32x96xbf16>
    %c1_88 = arith.constant 1 : index
    %c0_89 = arith.constant 0 : index
    %c0_90 = arith.constant 0 : index
    %176 = vector.load %arg23[%c1_88, %c0_89, %c0_90] : memref<3x1x96xf32, #tpu.memory_space<vmem>>, vector<1x1x96xf32>
    %177 = vector.shape_cast %176 : vector<1x1x96xf32> to vector<1x96xf32>
    %c1_91 = arith.constant 1 : index
    %c0_92 = arith.constant 0 : index
    %c0_93 = arith.constant 0 : index
    %178 = vector.load %arg24[%c1_91, %c0_92, %c0_93] : memref<3x1x32xf32, #tpu.memory_space<vmem>>, vector<1x1x32xf32>
    %179 = vector.shape_cast %178 : vector<1x1x32xf32> to vector<1x32xf32>
    %180 = arith.truncf %171 : vector<2x32xf32> to vector<2x32xbf16>
    %cst_94 = arith.constant dense<0.000000e+00> : vector<2x96xf32>
    %181 = tpu.matmul %180, %173, %cst_94 {dimension_numbers = #tpu.dot_dimension_numbers<[1], [0], [0], [1], [0, 0, 1, 1], [], []>} : vector<2x32xbf16>, vector<32x96xbf16>, vector<2x96xf32> -> vector<2x96xf32>
    %182 = vector.broadcast %177 : vector<1x96xf32> to vector<2x96xf32>
    %183 = arith.addf %181, %182 : vector<2x96xf32>
    %184 = arith.truncf %147 : vector<2x32xf32> to vector<2x32xbf16>
    %cst_95 = arith.constant dense<0.000000e+00> : vector<2x96xf32>
    %185 = tpu.matmul %184, %175, %cst_95 {dimension_numbers = #tpu.dot_dimension_numbers<[1], [0], [0], [1], [0, 0, 1, 1], [], []>} : vector<2x32xbf16>, vector<32x96xbf16>, vector<2x96xf32> -> vector<2x96xf32>
    %186 = vector.extract_strided_slice %183 {offsets = [0, 0], sizes = [2, 64], strides = [1, 1]} : vector<2x96xf32> to vector<2x64xf32>
    %187 = vector.extract_strided_slice %185 {offsets = [0, 0], sizes = [2, 64], strides = [1, 1]} : vector<2x96xf32> to vector<2x64xf32>
    %188 = arith.addf %186, %187 : vector<2x64xf32>
    %189 = arith.negf %188 : vector<2x64xf32>
    %190 = math.exp %189 : vector<2x64xf32>
    %cst_96 = arith.constant 1.000000e+00 : f32
    %191 = vector.broadcast %cst_96 : f32 to vector<2x64xf32>
    %192 = arith.addf %191, %190 : vector<2x64xf32>
    %193 = arith.divf %191, %192 : vector<2x64xf32>
    %194 = vector.extract_strided_slice %193 {offsets = [0, 0], sizes = [2, 32], strides = [1, 1]} : vector<2x64xf32> to vector<2x32xf32>
    %195 = vector.extract_strided_slice %193 {offsets = [0, 32], sizes = [2, 32], strides = [1, 1]} : vector<2x64xf32> to vector<2x32xf32>
    %196 = vector.extract_strided_slice %183 {offsets = [0, 64], sizes = [2, 32], strides = [1, 1]} : vector<2x96xf32> to vector<2x32xf32>
    %197 = vector.extract_strided_slice %185 {offsets = [0, 64], sizes = [2, 32], strides = [1, 1]} : vector<2x96xf32> to vector<2x32xf32>
    %198 = vector.broadcast %179 : vector<1x32xf32> to vector<2x32xf32>
    %199 = arith.addf %197, %198 : vector<2x32xf32>
    %200 = arith.mulf %194, %199 : vector<2x32xf32>
    %201 = arith.addf %196, %200 : vector<2x32xf32>
    %202 = math.tanh %201 : vector<2x32xf32>
    %cst_97 = arith.constant 1.000000e+00 : f32
    %203 = vector.broadcast %cst_97 : f32 to vector<2x32xf32>
    %204 = arith.subf %203, %195 : vector<2x32xf32>
    %205 = arith.mulf %204, %202 : vector<2x32xf32>
    %206 = arith.mulf %195, %147 : vector<2x32xf32>
    %207 = arith.addf %205, %206 : vector<2x32xf32>
    %c2 = arith.constant 2 : index
    %c0_98 = arith.constant 0 : index
    %208 = vector.load %arg25[%c2, %c0_98] : memref<6x32xf32, #tpu.memory_space<vmem>>, vector<2x32xf32>
    tpu.vector_store %arg25[%c2, %c0_98], %207 {strides = array<i32>} : memref<6x32xf32, #tpu.memory_space<vmem>>, vector<2x32xf32>,
    %209 = arith.truncf %207 : vector<2x32xf32> to vector<2x32xbf16>
    %cst_99 = arith.constant dense<0.000000e+00> : vector<2x32xf32>
    %210 = tpu.matmul %209, %82, %cst_99 {dimension_numbers = #tpu.dot_dimension_numbers<[1], [0], [0], [1], [0, 0, 1, 1], [], []>} : vector<2x32xbf16>, vector<32x32xbf16>, vector<2x32xf32> -> vector<2x32xf32>
    %211 = vector.broadcast %83 : vector<1x32xf32> to vector<2x32xf32>
    %212 = arith.addf %210, %211 : vector<2x32xf32>
    %213 = arith.truncf %212 : vector<2x32xf32> to vector<2x32xbf16>
    %cst_100 = arith.constant dense<0.000000e+00> : vector<2x16xf32>
    %214 = tpu.matmul %213, %79, %cst_100 {dimension_numbers = #tpu.dot_dimension_numbers<[1], [1], [0], [0], [0, 0, 1, 0], [], []>} : vector<2x32xbf16>, vector<16x32xbf16>, vector<2x16xf32> -> vector<2x16xf32>
    %215 = arith.addf %214, %86 : vector<2x16xf32>
    %cst_101 = arith.constant dense<0xFF800000> : vector<2xf32>
    %216 = vector.multi_reduction <maximumf>, %215, %cst_101 [1] : vector<2x16xf32> to vector<2xf32>
    %217 = vector.shape_cast %216 : vector<2xf32> to vector<2x1xf32>
    %218 = vector.broadcast %217 : vector<2x1xf32> to vector<2x16xf32>
    %219 = arith.subf %215, %218 : vector<2x16xf32>
    %220 = math.exp %219 : vector<2x16xf32>
    %cst_102 = arith.constant dense<0.000000e+00> : vector<2xf32>
    %221 = vector.multi_reduction <add>, %220, %cst_102 [1] : vector<2x16xf32> to vector<2xf32>
    %222 = vector.shape_cast %221 : vector<2xf32> to vector<2x1xf32>
    %223 = tpu.reciprocal %222 {approx = true} : vector<2x1xf32> -> vector<2x1xf32>
    %224 = vector.broadcast %223 : vector<2x1xf32> to vector<2x16xf32>
    %225 = arith.mulf %220, %224 : vector<2x16xf32>
    %226 = arith.truncf %225 : vector<2x16xf32> to vector<2x16xbf16>
    %cst_103 = arith.constant dense<0.000000e+00> : vector<2x32xf32>
    %227 = tpu.matmul %226, %81, %cst_103 {dimension_numbers = #tpu.dot_dimension_numbers<[1], [0], [0], [1], [0, 0, 1, 1], [], []>} : vector<2x16xbf16>, vector<16x32xbf16>, vector<2x32xf32> -> vector<2x32xf32>
    %228 = arith.truncf %227 : vector<2x32xf32> to vector<2x32xbf16>
    %cst_104 = arith.constant dense<0.000000e+00> : vector<2x32xf32>
    %229 = tpu.matmul %228, %84, %cst_104 {dimension_numbers = #tpu.dot_dimension_numbers<[1], [0], [0], [1], [0, 0, 1, 1], [], []>} : vector<2x32xbf16>, vector<32x32xbf16>, vector<2x32xf32> -> vector<2x32xf32>
    %230 = vector.broadcast %85 : vector<1x32xf32> to vector<2x32xf32>
    %231 = arith.addf %229, %230 : vector<2x32xf32>
    %c2_105 = arith.constant 2 : index
    %c0_106 = arith.constant 0 : index
    %c0_107 = arith.constant 0 : index
    %232 = vector.load %arg21[%c2_105, %c0_106, %c0_107] : memref<3x32x96xbf16, #tpu.memory_space<vmem>>, vector<1x32x96xbf16>
    %233 = vector.shape_cast %232 : vector<1x32x96xbf16> to vector<32x96xbf16>
    %c2_108 = arith.constant 2 : index
    %c0_109 = arith.constant 0 : index
    %c0_110 = arith.constant 0 : index
    %234 = vector.load %arg22[%c2_108, %c0_109, %c0_110] : memref<3x32x96xbf16, #tpu.memory_space<vmem>>, vector<1x32x96xbf16>
    %235 = vector.shape_cast %234 : vector<1x32x96xbf16> to vector<32x96xbf16>
    %c2_111 = arith.constant 2 : index
    %c0_112 = arith.constant 0 : index
    %c0_113 = arith.constant 0 : index
    %236 = vector.load %arg23[%c2_111, %c0_112, %c0_113] : memref<3x1x96xf32, #tpu.memory_space<vmem>>, vector<1x1x96xf32>
    %237 = vector.shape_cast %236 : vector<1x1x96xf32> to vector<1x96xf32>
    %c2_114 = arith.constant 2 : index
    %c0_115 = arith.constant 0 : index
    %c0_116 = arith.constant 0 : index
    %238 = vector.load %arg24[%c2_114, %c0_115, %c0_116] : memref<3x1x32xf32, #tpu.memory_space<vmem>>, vector<1x1x32xf32>
    %239 = vector.shape_cast %238 : vector<1x1x32xf32> to vector<1x32xf32>
    %240 = arith.truncf %231 : vector<2x32xf32> to vector<2x32xbf16>
    %cst_117 = arith.constant dense<0.000000e+00> : vector<2x96xf32>
    %241 = tpu.matmul %240, %233, %cst_117 {dimension_numbers = #tpu.dot_dimension_numbers<[1], [0], [0], [1], [0, 0, 1, 1], [], []>} : vector<2x32xbf16>, vector<32x96xbf16>, vector<2x96xf32> -> vector<2x96xf32>
    %242 = vector.broadcast %237 : vector<1x96xf32> to vector<2x96xf32>
    %243 = arith.addf %241, %242 : vector<2x96xf32>
    %244 = arith.truncf %207 : vector<2x32xf32> to vector<2x32xbf16>
    %cst_118 = arith.constant dense<0.000000e+00> : vector<2x96xf32>
    %245 = tpu.matmul %244, %235, %cst_118 {dimension_numbers = #tpu.dot_dimension_numbers<[1], [0], [0], [1], [0, 0, 1, 1], [], []>} : vector<2x32xbf16>, vector<32x96xbf16>, vector<2x96xf32> -> vector<2x96xf32>
    %246 = vector.extract_strided_slice %243 {offsets = [0, 0], sizes = [2, 64], strides = [1, 1]} : vector<2x96xf32> to vector<2x64xf32>
    %247 = vector.extract_strided_slice %245 {offsets = [0, 0], sizes = [2, 64], strides = [1, 1]} : vector<2x96xf32> to vector<2x64xf32>
    %248 = arith.addf %246, %247 : vector<2x64xf32>
    %249 = arith.negf %248 : vector<2x64xf32>
    %250 = math.exp %249 : vector<2x64xf32>
    %cst_119 = arith.constant 1.000000e+00 : f32
    %251 = vector.broadcast %cst_119 : f32 to vector<2x64xf32>
    %252 = arith.addf %251, %250 : vector<2x64xf32>
    %253 = arith.divf %251, %252 : vector<2x64xf32>
    %254 = vector.extract_strided_slice %253 {offsets = [0, 0], sizes = [2, 32], strides = [1, 1]} : vector<2x64xf32> to vector<2x32xf32>
    %255 = vector.extract_strided_slice %253 {offsets = [0, 32], sizes = [2, 32], strides = [1, 1]} : vector<2x64xf32> to vector<2x32xf32>
    %256 = vector.extract_strided_slice %243 {offsets = [0, 64], sizes = [2, 32], strides = [1, 1]} : vector<2x96xf32> to vector<2x32xf32>
    %257 = vector.extract_strided_slice %245 {offsets = [0, 64], sizes = [2, 32], strides = [1, 1]} : vector<2x96xf32> to vector<2x32xf32>
    %258 = vector.broadcast %239 : vector<1x32xf32> to vector<2x32xf32>
    %259 = arith.addf %257, %258 : vector<2x32xf32>
    %260 = arith.mulf %254, %259 : vector<2x32xf32>
    %261 = arith.addf %256, %260 : vector<2x32xf32>
    %262 = math.tanh %261 : vector<2x32xf32>
    %cst_120 = arith.constant 1.000000e+00 : f32
    %263 = vector.broadcast %cst_120 : f32 to vector<2x32xf32>
    %264 = arith.subf %263, %255 : vector<2x32xf32>
    %265 = arith.mulf %264, %262 : vector<2x32xf32>
    %266 = arith.mulf %255, %207 : vector<2x32xf32>
    %267 = arith.addf %265, %266 : vector<2x32xf32>
    %c4 = arith.constant 4 : index
    %c0_121 = arith.constant 0 : index
    %268 = vector.load %arg25[%c4, %c0_121] : memref<6x32xf32, #tpu.memory_space<vmem>>, vector<2x32xf32>
    tpu.vector_store %arg25[%c4, %c0_121], %267 {strides = array<i32>} : memref<6x32xf32, #tpu.memory_space<vmem>>, vector<2x32xf32>,
    return
  }
}

</mosaic_0001>

<llo_original>
// kernel: eq.19
$region0: #{eq.19}
  %s0 = inlined_call_operand.vmem [shape: s32[2,8], index: 0, kind: input, shape index: {}]
  %s1 = inlined_call_operand.vmem [shape: s32[16], index: 1, kind: output, shape index: {}]
  $region1: #{eq.19} parent=0
    #allocation0 [shape = 'u8[4096]{0}', space=vmem, size = 0x1000, scoped, tag = 'scoped mem for output reshape']
    #allocation1 [shape = 'u8[4096]{0}', space=vmem, size = 0x1000, scoped, tag = 'scoped mem for input reshape']
    %s3 = sshll.u32 1, 2
    %s4 = ssub.s32 %s3, 1
    %v5 = vld [vmem:[%s0] sm:%s4]
    %6 = vst [vmem:[#allocation1] sm:%s4] %v5
    %v7 = vld [vmem:[#allocation1] sm:$0x1]
    %vm8 = vcmask 64512
    %9 = vst.msk [vmem:[#allocation0] sm:$0x1] %vm8, %v7
    %s10 = scalar_lea.vmem [#allocation1], 1
    %v11 = vld [vmem:[%s10] sm:$0x1]
    %12 = vrot.lane.b32.xlu0 %v11, 8
    %v13 = vpop.permute.xlu0 %12
    %vm14 = vcmask 130112
    %15 = vst.msk [vmem:[#allocation0] sm:$0x1] %vm14, %v13
    %s17 = sshll.u32 1, 1
    %s18 = ssub.s32 %s17, 1
    %v20 = vld [vmem:[#allocation0] sm:%s18]
    %s21 = sshll.u32 1, 1
    %s22 = ssub.s32 %s21, 1
    %23 = vst [vmem:[%s1] sm:%s22] %v20

// kernel: eq.22
$region0: #{eq.22}
  %s0 = inlined_call_operand.vmem [shape: s32[2,6], index: 0, kind: input, shape index: {}]
  %s1 = inlined_call_operand.vmem [shape: s32[12], index: 1, kind: output, shape index: {}]
  $region1: #{eq.22} parent=0
    #allocation0 [shape = 'u8[4096]{0}', space=vmem, size = 0x1000, scoped, tag = 'scoped mem for output reshape']
    #allocation1 [shape = 'u8[4096]{0}', space=vmem, size = 0x1000, scoped, tag = 'scoped mem for input reshape']
    %s3 = sshll.u32 1, 2
    %s4 = ssub.s32 %s3, 1
    %v5 = vld [vmem:[%s0] sm:%s4]
    %6 = vst [vmem:[#allocation1] sm:%s4] %v5
    %v7 = vld [vmem:[#allocation1] sm:$0x1]
    %vm8 = vcmask 48128
    %9 = vst.msk [vmem:[#allocation0] sm:$0x1] %vm8, %v7
    %s10 = scalar_lea.vmem [#allocation1], 1
    %v11 = vld [vmem:[%s10] sm:$0x1]
    %12 = vrot.lane.b32.xlu0 %v11, 6
    %v13 = vpop.permute.xlu0 %12
    %vm14 = vcmask 97328
    %15 = vst.msk [vmem:[#allocation0] sm:$0x1] %vm14, %v13
    %s17 = sshll.u32 1, 1
    %s18 = ssub.s32 %s17, 1
    %v20 = vld [vmem:[#allocation0] sm:%s18]
    %s21 = sshll.u32 1, 1
    %s22 = ssub.s32 %s21, 1
    %23 = vst [vmem:[%s1] sm:%s22] %v20

// kernel: ra_decoder_forward_pallas.1
$region0: #{ra_decoder_forward_pallas.1}
  #allocation0 [shape = 'u32[]', space=smem, size = 0x4, offset = 0x4, fixed_abs, tag = 'smem constant byte address 0x4 - core index']
  #allocation1 [shape = 'u32[144,128]{1,0:T(1,128)}', space=vmem, size = 0x12000, scoped, tag = 'internal scratch']
  %s0 = inlined_call_operand.vmem [shape: f32[16,32], index: 0, kind: input, shape index: {}]
  %s1 = inlined_call_operand.vmem [shape: f32[12,32], index: 1, kind: input, shape index: {}]
  %s2 = inlined_call_operand.vmem [shape: f32[16,12], index: 2, kind: input, shape index: {}]
  %s3 = inlined_call_operand.vmem [shape: f32[2,16], index: 3, kind: input, shape index: {}]
  %s4 = inlined_call_operand.vmem [shape: f32[1,2,32], index: 4, kind: input, shape index: {}]
  %s5 = inlined_call_operand.vmem [shape: bf16[32,32], index: 5, kind: input, shape index: {}]
  %s6 = inlined_call_operand.vmem [shape: f32[1,32], index: 6, kind: input, shape index: {}]
  %s7 = inlined_call_operand.vmem [shape: bf16[32,64], index: 7, kind: input, shape index: {}]
  %s8 = inlined_call_operand.vmem [shape: f32[1,64], index: 8, kind: input, shape index: {}]
  %s9 = inlined_call_operand.vmem [shape: bf16[32,32], index: 9, kind: input, shape index: {}]
  %s10 = inlined_call_operand.vmem [shape: f32[1,32], index: 10, kind: input, shape index: {}]
  %s11 = inlined_call_operand.vmem [shape: bf16[32,32], index: 11, kind: input, shape index: {}]
  %s12 = inlined_call_operand.vmem [shape: f32[1,32], index: 12, kind: input, shape index: {}]
  %s13 = inlined_call_operand.vmem [shape: bf16[32,64], index: 13, kind: input, shape index: {}]
  %s14 = inlined_call_operand.vmem [shape: f32[1,64], index: 14, kind: input, shape index: {}]
  %s15 = inlined_call_operand.vmem [shape: bf16[32,32], index: 15, kind: input, shape index: {}]
  %s16 = inlined_call_operand.vmem [shape: f32[1,32], index: 16, kind: input, shape index: {}]
  %s17 = inlined_call_operand.vmem [shape: bf16[32,96], index: 17, kind: input, shape index: {}]
  %s18 = inlined_call_operand.vmem [shape: bf16[32,96], index: 18, kind: input, shape index: {}]
  %s19 = inlined_call_operand.vmem [shape: f32[1,96], index: 19, kind: input, shape index: {}]
  %s20 = inlined_call_operand.vmem [shape: f32[1,32], index: 20, kind: input, shape index: {}]
  %s21 = inlined_call_operand.vmem [shape: bf16[3,32,96], index: 21, kind: input, shape index: {}]
  %s22 = inlined_call_operand.vmem [shape: bf16[3,32,96], index: 22, kind: input, shape index: {}]
  %s23 = inlined_call_operand.vmem [shape: f32[3,1,96], index: 23, kind: input, shape index: {}]
  %s24 = inlined_call_operand.vmem [shape: f32[3,1,32], index: 24, kind: input, shape index: {}]
  %s25 = inlined_call_operand.vmem [shape: f32[6,32], index: 25, kind: output, shape index: {}]
  %s26 = sld [smem:[#allocation0]]
  $region110: #{ra_decoder_forward_pallas.1} parent=0
    _
  %s28 = ssub.s32 1, %s26
  %s29 = scalar_select 0, %s28, %s26
  // Predicated region
  $region2: #{ra_decoder_forward_pallas.1} parent=0 // pred_check
    _
  $region3: #{ra_decoder_forward_pallas.1} parent=0 // pred_check_branch
    %31 = sbr.rel (0) target = $region5
  $region4: #{ra_decoder_forward_pallas.1} parent=0 // pred_region
    _
  $region5: #{ra_decoder_forward_pallas.1} parent=0 // pred_fallthru
    _
  // Predicated region
  $region6: #{ra_decoder_forward_pallas.1} parent=0 // pred_check
    _
  $region7: #{ra_decoder_forward_pallas.1} parent=0 // pred_check_branch
    %33 = sbr.rel (0) target = $region9
  $region8: #{ra_decoder_forward_pallas.1} parent=0 // pred_region
    _
  $region9: #{ra_decoder_forward_pallas.1} parent=0 // pred_fallthru
    _
  // Predicated region
  $region10: #{ra_decoder_forward_pallas.1} parent=0 // pred_check
    _
  $region11: #{ra_decoder_forward_pallas.1} parent=0 // pred_check_branch
    %35 = sbr.rel (0) target = $region13
  $region12: #{ra_decoder_forward_pallas.1} parent=0 // pred_region
    _
  $region13: #{ra_decoder_forward_pallas.1} parent=0 // pred_fallthru
    _
  // Predicated region
  $region14: #{ra_decoder_forward_pallas.1} parent=0 // pred_check
    _
  $region15: #{ra_decoder_forward_pallas.1} parent=0 // pred_check_branch
    %37 = sbr.rel (0) target = $region17
  $region16: #{ra_decoder_forward_pallas.1} parent=0 // pred_region
    _
  $region17: #{ra_decoder_forward_pallas.1} parent=0 // pred_fallthru
    _
  // Predicated region
  $region18: #{ra_decoder_forward_pallas.1} parent=0 // pred_check
    _
  $region19: #{ra_decoder_forward_pallas.1} parent=0 // pred_check_branch
    %39 = sbr.rel (0) target = $region21
  $region20: #{ra_decoder_forward_pallas.1} parent=0 // pred_region
    _
  $region21: #{ra_decoder_forward_pallas.1} parent=0 // pred_fallthru
    _
  // Predicated region
  $region22: #{ra_decoder_forward_pallas.1} parent=0 // pred_check
    _
  $region23: #{ra_decoder_forward_pallas.1} parent=0 // pred_check_branch
    %41 = sbr.rel (0) target = $region25
  $region24: #{ra_decoder_forward_pallas.1} parent=0 // pred_region
    _
  $region25: #{ra_decoder_forward_pallas.1} parent=0 // pred_fallthru
    _
  // Predicated region
  $region26: #{ra_decoder_forward_pallas.1} parent=0 // pred_check
    _
  $region27: #{ra_decoder_forward_pallas.1} parent=0 // pred_check_branch
    %43 = sbr.rel (0) target = $region29
  $region28: #{ra_decoder_forward_pallas.1} parent=0 // pred_region
    _
  $region29: #{ra_decoder_forward_pallas.1} parent=0 // pred_fallthru
    _
  // Predicated region
  $region30: #{ra_decoder_forward_pallas.1} parent=0 // pred_check
    _
  $region31: #{ra_decoder_forward_pallas.1} parent=0 // pred_check_branch
    %45 = sbr.rel (0) target = $region33
  $region32: #{ra_decoder_forward_pallas.1} parent=0 // pred_region
    _
  $region33: #{ra_decoder_forward_pallas.1} parent=0 // pred_fallthru
    _
  // Predicated region
  $region34: #{ra_decoder_forward_pallas.1} parent=0 // pred_check
    _
  $region35: #{ra_decoder_forward_pallas.1} parent=0 // pred_check_branch
    %47 = sbr.rel (0) target = $region37
  $region36: #{ra_decoder_forward_pallas.1} parent=0 // pred_region
    _
  $region37: #{ra_decoder_forward_pallas.1} parent=0 // pred_fallthru
    _
  // Predicated region
  $region38: #{ra_decoder_forward_pallas.1} parent=0 // pred_check
    _
  $region39: #{ra_decoder_forward_pallas.1} parent=0 // pred_check_branch
    %49 = sbr.rel (0) target = $region41
  $region40: #{ra_decoder_forward_pallas.1} parent=0 // pred_region
    _
  $region41: #{ra_decoder_forward_pallas.1} parent=0 // pred_fallthru
    _
  // Predicated region
  $region42: #{ra_decoder_forward_pallas.1} parent=0 // pred_check
    _
  $region43: #{ra_decoder_forward_pallas.1} parent=0 // pred_check_branch
    %51 = sbr.rel (0) target = $region45
  $region44: #{ra_decoder_forward_pallas.1} parent=0 // pred_region
    _
  $region45: #{ra_decoder_forward_pallas.1} parent=0 // pred_fallthru
    _
  // Predicated region
  $region46: #{ra_decoder_forward_pallas.1} parent=0 // pred_check
    _
  $region47: #{ra_decoder_forward_pallas.1} parent=0 // pred_check_branch
    %53 = sbr.rel (0) target = $region49
  $region48: #{ra_decoder_forward_pallas.1} parent=0 // pred_region
    _
  $region49: #{ra_decoder_forward_pallas.1} parent=0 // pred_fallthru
    _
  // Predicated region
  $region50: #{ra_decoder_forward_pallas.1} parent=0 // pred_check
    _
  $region51: #{ra_decoder_forward_pallas.1} parent=0 // pred_check_branch
    %55 = sbr.rel (0) target = $region53
  $region52: #{ra_decoder_forward_pallas.1} parent=0 // pred_region
    _
  $region53: #{ra_decoder_forward_pallas.1} parent=0 // pred_fallthru
    _
  // Predicated region
  $region54: #{ra_decoder_forward_pallas.1} parent=0 // pred_check
    _
  $region55: #{ra_decoder_forward_pallas.1} parent=0 // pred_check_branch
    %57 = sbr.rel (0) target = $region57
  $region56: #{ra_decoder_forward_pallas.1} parent=0 // pred_region
    _
  $region57: #{ra_decoder_forward_pallas.1} parent=0 // pred_fallthru
    _
  // Predicated region
  $region58: #{ra_decoder_forward_pallas.1} parent=0 // pred_check
    _
  $region59: #{ra_decoder_forward_pallas.1} parent=0 // pred_check_branch
    %59 = sbr.rel (0) target = $region61
  $region60: #{ra_decoder_forward_pallas.1} parent=0 // pred_region
    _
  $region61: #{ra_decoder_forward_pallas.1} parent=0 // pred_fallthru
    _
  // Predicated region
  $region62: #{ra_decoder_forward_pallas.1} parent=0 // pred_check
    _
  $region63: #{ra_decoder_forward_pallas.1} parent=0 // pred_check_branch
    %61 = sbr.rel (0) target = $region65
  $region64: #{ra_decoder_forward_pallas.1} parent=0 // pred_region
    _
  $region65: #{ra_decoder_forward_pallas.1} parent=0 // pred_fallthru
    _
  // Predicated region
  $region66: #{ra_decoder_forward_pallas.1} parent=0 // pred_check
    _
  $region67: #{ra_decoder_forward_pallas.1} parent=0 // pred_check_branch
    %63 = sbr.rel (0) target = $region69
  $region68: #{ra_decoder_forward_pallas.1} parent=0 // pred_region
    _
  $region69: #{ra_decoder_forward_pallas.1} parent=0 // pred_fallthru
    _
  // Predicated region
  $region70: #{ra_decoder_forward_pallas.1} parent=0 // pred_check
    _
  $region71: #{ra_decoder_forward_pallas.1} parent=0 // pred_check_branch
    %65 = sbr.rel (0) target = $region73
  $region72: #{ra_decoder_forward_pallas.1} parent=0 // pred_region
    _
  $region73: #{ra_decoder_forward_pallas.1} parent=0 // pred_fallthru
    _
  // Predicated region
  $region74: #{ra_decoder_forward_pallas.1} parent=0 // pred_check
    _
  $region75: #{ra_decoder_forward_pallas.1} parent=0 // pred_check_branch
    %67 = sbr.rel (0) target = $region77
  $region76: #{ra_decoder_forward_pallas.1} parent=0 // pred_region
    _
  $region77: #{ra_decoder_forward_pallas.1} parent=0 // pred_fallthru
    _
  // Predicated region
  $region78: #{ra_decoder_forward_pallas.1} parent=0 // pred_check
    _
  $region79: #{ra_decoder_forward_pallas.1} parent=0 // pred_check_branch
    %69 = sbr.rel (0) target = $region81
  $region80: #{ra_decoder_forward_pallas.1} parent=0 // pred_region
    _
  $region81: #{ra_decoder_forward_pallas.1} parent=0 // pred_fallthru
    _
  // Predicated region
  $region82: #{ra_decoder_forward_pallas.1} parent=0 // pred_check
    _
  $region83: #{ra_decoder_forward_pallas.1} parent=0 // pred_check_branch
    %71 = sbr.rel (0) target = $region85
  $region84: #{ra_decoder_forward_pallas.1} parent=0 // pred_region
    _
  $region85: #{ra_decoder_forward_pallas.1} parent=0 // pred_fallthru
    _
  // Predicated region
  $region86: #{ra_decoder_forward_pallas.1} parent=0 // pred_check
    _
  $region87: #{ra_decoder_forward_pallas.1} parent=0 // pred_check_branch
    %73 = sbr.rel (0) target = $region89
  $region88: #{ra_decoder_forward_pallas.1} parent=0 // pred_region
    _
  $region89: #{ra_decoder_forward_pallas.1} parent=0 // pred_fallthru
    _
  // Predicated region
  $region90: #{ra_decoder_forward_pallas.1} parent=0 // pred_check
    _
  $region91: #{ra_decoder_forward_pallas.1} parent=0 // pred_check_branch
    %75 = sbr.rel (0) target = $region93
  $region92: #{ra_decoder_forward_pallas.1} parent=0 // pred_region
    _
  $region93: #{ra_decoder_forward_pallas.1} parent=0 // pred_fallthru
    _
  // Predicated region
  $region94: #{ra_decoder_forward_pallas.1} parent=0 // pred_check
    _
  $region95: #{ra_decoder_forward_pallas.1} parent=0 // pred_check_branch
    %77 = sbr.rel (0) target = $region97
  $region96: #{ra_decoder_forward_pallas.1} parent=0 // pred_region
    _
  $region97: #{ra_decoder_forward_pallas.1} parent=0 // pred_fallthru
    _
  // Predicated region
  $region98: #{ra_decoder_forward_pallas.1} parent=0 // pred_check
    _
  $region99: #{ra_decoder_forward_pallas.1} parent=0 // pred_check_branch
    %79 = sbr.rel (0) target = $region101
  $region100: #{ra_decoder_forward_pallas.1} parent=0 // pred_region
    _
  $region101: #{ra_decoder_forward_pallas.1} parent=0 // pred_fallthru
    _
  %v81 = vld [vmem:[%s0] sm:$0xff]
  %v82 = vld [vmem:[%s0 + $0x8] sm:$0xff]
  %v83 = vld [vmem:[%s1] sm:$0xff]
  %v84 = vld [vmem:[%s1 + $0x8] sm:$0xf]
  %v85 = vld [vmem:[%s5] sm:$0xf]
  %v86 = vld [vmem:[%s5 + $0x4] sm:$0xf]
  %v87 = vld [vmem:[%s5 + $0x8] sm:$0xf]
  %v88 = vld [vmem:[%s5 + $0xc] sm:$0xf]
  %v89 = vpack.c.bf16 %v82, %v81
  %v90 = vld [vmem:[%s6] sm:$0x1]
  %v92 = vlaneseq
  %v93 = vshrl.u32 %v92, 7
  %v94 = vsub.s32 0, %v93
  %v95 = vrot.slane %v90, %v94
  %v101 = vunpack.c.l.b16 %v85
  %v102 = vunpack.c.l.b16 %v86
  %v103 = vunpack.c.l.b16 %v87
  %v104 = vunpack.c.l.b16 %v88
  %v105 = vpack.c.b16 %v102, %v101
  %v106 = vpack.c.b16 %v104, %v103
  %vm109 = vcmask 261120
  %v111 = vsel %vm109, %v89, 0
  %113 = vmatprep.subr.bf16.mxu0 0
  %114 = vmatpush1.bf16.msra.mxu0 0
  %115 = vmatprep.subr.bf16.mxu0 0
  %116 = vmatpush1.bf16.msra.mxu0 0
  %117 = vmatprep.subr.bf16.mxu0 0
  %118 = vmatpush1.bf16.msra.mxu0 0
  %119 = vmatprep.subr.bf16.mxu0 0
  %120 = vmatpush1.bf16.msra.mxu0 0
  %121 = vmatprep.subr.bf16.mxu0 0
  %122 = vmatpush1.bf16.msra.mxu0 0
  %123 = vmatprep.subr.bf16.mxu0 0
  %124 = vmatpush1.bf16.msra.mxu0 0
  %125 = vmatprep.subr.bf16.mxu0 0
  %126 = vmatpush1.bf16.msra.mxu0 %v106
  %127 = vmatprep.subr.bf16.mxu0 0
  %128 = vmatpush1.bf16.msra.mxu0 %v105
  %129 = vmatprep.subr.bf16.mxu0 0
  %130 = vmatpush2.bf16.msra.mxu0 0
  %131 = vmatprep.subr.bf16.mxu0 0
  %132 = vmatpush2.bf16.msra.mxu0 0
  %133 = vmatprep.subr.bf16.mxu0 0
  %134 = vmatpush2.bf16.msra.mxu0 0
  %135 = vmatprep.subr.bf16.mxu0 0
  %136 = vmatpush2.bf16.msra.mxu0 0
  %137 = vmatprep.subr.bf16.mxu0 0
  %138 = vmatpush2.bf16.msra.mxu0 0
  %139 = vmatprep.subr.bf16.mxu0 0
  %140 = vmatpush2.bf16.msra.mxu0 0
  %141 = vmatprep.subr.bf16.mxu0 0
  %142 = vmatpush2.bf16.msra.mxu0 0
  %143 = vmatprep.subr.bf16.mxu0 0
  %144 = vmatpush2.bf16.msra.mxu0 0
  %145 = vmatprep.mubr.bf16.mxu0 0
  %146 = vmatmul.mubr.bf16.gmra.mxu0 %v111
  %v147 = vpop.f32.mrf.mxu0
  %v148 = vadd.f32 %v95, %v147
  %v149 = vpop.f32.mrf.mxu0
  %v150 = vpop.f32.mrf.mxu0
  %v151 = vadd.f32 %v95, %v150
  %v152 = vpop.f32.mrf.mxu0
  %153 = vdwg.mxu0
  %v154 = vld [vmem:[%s7] sm:$0xf]
  %v155 = vld [vmem:[%s7 + $0x4] sm:$0xf]
  %v156 = vld [vmem:[%s7 + $0x8] sm:$0xf]
  %v157 = vld [vmem:[%s7 + $0xc] sm:$0xf]
  %v158 = vpack.c.bf16 %v84, %v83
  %v159 = vld [vmem:[%s8] sm:$0x1]
  %v161 = vlaneseq
  %v162 = vshrl.u32 %v161, 7
  %v163 = vsub.s32 0, %v162
  %v164 = vrot.slane %v159, %v163
  %v170 = vunpack.c.l.b16 %v154
  %v171 = vunpack.c.l.b16 %v155
  %v172 = vunpack.c.l.b16 %v156
  %v173 = vunpack.c.l.b16 %v157
  %v174 = vpack.c.b16 %v171, %v170
  %v175 = vpack.c.b16 %v173, %v172
  %v179 = vsel %vm109, %v158, 0
  %181 = vmatprep.subr.bf16.mxu0 0
  %182 = vmatpush1.bf16.msra.mxu0 0
  %183 = vmatprep.subr.bf16.mxu0 0
  %184 = vmatpush1.bf16.msra.mxu0 0
  %185 = vmatprep.subr.bf16.mxu0 0
  %186 = vmatpush1.bf16.msra.mxu0 0
  %187 = vmatprep.subr.bf16.mxu0 0
  %188 = vmatpush1.bf16.msra.mxu0 0
  %189 = vmatprep.subr.bf16.mxu0 0
  %190 = vmatpush1.bf16.msra.mxu0 0
  %191 = vmatprep.subr.bf16.mxu0 0
  %192 = vmatpush1.bf16.msra.mxu0 0
  %193 = vmatprep.subr.bf16.mxu0 0
  %194 = vmatpush1.bf16.msra.mxu0 %v175
  %195 = vmatprep.subr.bf16.mxu0 0
  %196 = vmatpush1.bf16.msra.mxu0 %v174
  %197 = vmatprep.subr.bf16.mxu0 0
  %198 = vmatpush2.bf16.msra.mxu0 0
  %199 = vmatprep.subr.bf16.mxu0 0
  %200 = vmatpush2.bf16.msra.mxu0 0
  %201 = vmatprep.subr.bf16.mxu0 0
  %202 = vmatpush2.bf16.msra.mxu0 0
  %203 = vmatprep.subr.bf16.mxu0 0
  %204 = vmatpush2.bf16.msra.mxu0 0
  %205 = vmatprep.subr.bf16.mxu0 0
  %206 = vmatpush2.bf16.msra.mxu0 0
  %207 = vmatprep.subr.bf16.mxu0 0
  %208 = vmatpush2.bf16.msra.mxu0 0
  %209 = vmatprep.subr.bf16.mxu0 0
  %210 = vmatpush2.bf16.msra.mxu0 0
  %211 = vmatprep.subr.bf16.mxu0 0
  %212 = vmatpush2.bf16.msra.mxu0 0
  %213 = vmatprep.mubr.bf16.mxu0 0
  %214 = vmatmul.mubr.bf16.gmra.mxu0 %v179
  %v215 = vpop.f32.mrf.mxu0
  %v216 = vadd.f32 %v164, %v215
  %v217 = vpop.f32.mrf.mxu0
  %v218 = vpop.f32.mrf.mxu0
  %v219 = vadd.f32 %v164, %v218
  %v220 = vpop.f32.mrf.mxu0
  %221 = vdwg.mxu0
  %v222 = vpack.c.bf16 %v219, %v216
  %v223 = vld [vmem:[%s2] sm:$0xff]
  %v224 = vld [vmem:[%s2 + $0x8] sm:$0xff]
  %v225 = vld [vmem:[%s9] sm:$0xf]
  %v226 = vld [vmem:[%s9 + $0x4] sm:$0xf]
  %v227 = vld [vmem:[%s9 + $0x8] sm:$0xf]
  %v228 = vld [vmem:[%s9 + $0xc] sm:$0xf]
  %v229 = vld [vmem:[%s10] sm:$0x1]
  %v230 = vpack.c.bf16 %v151, %v148
  %v232 = vsel %vm109, %v230, 0
  %v235 = vsel %vm109, %v222, 0
  %237 = vmatprep.subr.bf16.mxu0 0
  %238 = vmatpush1.bf16.xpose.msra.mxu0 0
  %239 = vmatprep.subr.bf16.mxu0 0
  %240 = vmatpush1.bf16.xpose.msra.mxu0 0
  %241 = vmatprep.subr.bf16.mxu0 0
  %242 = vmatpush1.bf16.xpose.msra.mxu0 0
  %243 = vmatprep.subr.bf16.mxu0 0
  %244 = vmatpush1.bf16.xpose.msra.mxu0 0
  %245 = vmatprep.subr.bf16.mxu0 0
  %246 = vmatpush1.bf16.xpose.msra.mxu0 0
  %247 = vmatprep.subr.bf16.mxu0 0
  %248 = vmatpush1.bf16.xpose.msra.mxu0 0
  %249 = vmatprep.subr.bf16.mxu0 0
  %250 = vmatpush1.bf16.xpose.msra.mxu0 0
  %251 = vmatprep.subr.bf16.mxu0 0
  %252 = vmatpush1.bf16.xpose.msra.mxu0 %v235
  %253 = vmatprep.subr.bf16.mxu0 0
  %254 = vmatpush2.bf16.xpose.msra.mxu0 0
  %255 = vmatprep.subr.bf16.mxu0 0
  %256 = vmatpush2.bf16.xpose.msra.mxu0 0
  %257 = vmatprep.subr.bf16.mxu0 0
  %258 = vmatpush2.bf16.xpose.msra.mxu0 0
  %259 = vmatprep.subr.bf16.mxu0 0
  %260 = vmatpush2.bf16.xpose.msra.mxu0 0
  %261 = vmatprep.subr.bf16.mxu0 0
  %262 = vmatpush2.bf16.xpose.msra.mxu0 0
  %263 = vmatprep.subr.bf16.mxu0 0
  %264 = vmatpush2.bf16.xpose.msra.mxu0 0
  %265 = vmatprep.subr.bf16.mxu0 0
  %266 = vmatpush2.bf16.xpose.msra.mxu0 0
  %267 = vmatprep.subr.bf16.mxu0 0
  %268 = vmatpush2.bf16.xpose.msra.mxu0 0
  %269 = vmatprep.mubr.bf16.mxu0 0
  %270 = vmatmul.mubr.bf16.gmra.mxu0 %v232
  %v271 = vpop.f32.mrf.mxu0
  %v272 = vadd.f32 %v223, %v271
  %v273 = vpop.f32.mrf.mxu0
  %v274 = vpop.f32.mrf.mxu0
  %v275 = vadd.f32 %v224, %v274
  %v276 = vpop.f32.mrf.mxu0
  %277 = vdwg.mxu0
  %vm278 = vcmask 97280
  %v279 = vsel %vm278, %v272, -inf
  %280 = vmax.xlane.f32.xlu0 %v279
  %v281 = vpop.xlane.xlu0 %280
  %v282 = vsel %vm278, %v275, -inf
  %283 = vmax.xlane.f32.xlu0 %v282
  %v284 = vpop.xlane.xlu0 %283
  %v285 = vsub.f32 %v272, %v281
  %v286 = vsub.f32 %v275, %v284
  %v287 = vmul.f32 %v285, 1.442695
  %v288 = vpow.pop %v287
  %v289 = vmul.f32 %v286, 1.442695
  %v290 = vpow.pop %v289
  %v291 = vsel %vm278, %v288, 0.0
  %292 = vadd.xlane.f32.xlu0 %v291
  %v293 = vpop.xlane.xlu0 %292
  %v294 = vsel %vm278, %v290, 0.0
  %295 = vadd.xlane.f32.xlu0 %v294
  %v296 = vpop.xlane.xlu0 %295
  %v297 = vrcp.pop %v293
  %v298 = vrcp.pop %v296
  %v299 = vmul.f32 %v288, %v297
  %v300 = vmul.f32 %v290, %v298
  %v301 = vpack.c.bf16 %v300, %v299
  %303 = vrot.lane.b32.xlu0 %v222, 96
  %v304 = vpop.permute.xlu0 %303
  %v306 = vsel %vm278, %v301, 0
  %vm308 = vcmask 1045504
  %v310 = vsel %vm308, %v304, 0
  %312 = vmatprep.subr.bf16.mxu0 0
  %313 = vmatpush1.bf16.msra.mxu0 0
  %314 = vmatprep.subr.bf16.mxu0 0
  %315 = vmatpush1.bf16.msra.mxu0 0
  %316 = vmatprep.subr.bf16.mxu0 0
  %317 = vmatpush1.bf16.msra.mxu0 0
  %318 = vmatprep.subr.bf16.mxu0 0
  %319 = vmatpush1.bf16.msra.mxu0 0
  %320 = vmatprep.subr.bf16.mxu0 0
  %321 = vmatpush1.bf16.msra.mxu0 0
  %322 = vmatprep.subr.bf16.mxu0 0
  %323 = vmatpush1.bf16.msra.mxu0 0
  %324 = vmatprep.subr.bf16.mxu0 0
  %325 = vmatpush1.bf16.msra.mxu0 0
  %326 = vmatprep.subr.bf16.mxu0 0
  %327 = vmatpush1.bf16.msra.mxu0 %v310
  %328 = vmatprep.subr.bf16.mxu0 0
  %329 = vmatpush2.bf16.msra.mxu0 0
  %330 = vmatprep.subr.bf16.mxu0 0
  %331 = vmatpush2.bf16.msra.mxu0 0
  %332 = vmatprep.subr.bf16.mxu0 0
  %333 = vmatpush2.bf16.msra.mxu0 0
  %334 = vmatprep.subr.bf16.mxu0 0
  %335 = vmatpush2.bf16.msra.mxu0 0
  %336 = vmatprep.subr.bf16.mxu0 0
  %337 = vmatpush2.bf16.msra.mxu0 0
  %338 = vmatprep.subr.bf16.mxu0 0
  %339 = vmatpush2.bf16.msra.mxu0 0
  %340 = vmatprep.subr.bf16.mxu0 0
  %341 = vmatpush2.bf16.msra.mxu0 0
  %342 = vmatprep.subr.bf16.mxu0 0
  %343 = vmatpush2.bf16.msra.mxu0 0
  %344 = vmatprep.mubr.bf16.mxu0 0
  %345 = vmatmul.mubr.bf16.gmra.mxu0 %v306
  %v346 = vpop.f32.mrf.mxu0
  %v347 = vadd.f32 0.0, %v346
  %v348 = vpop.f32.mrf.mxu0
  %v349 = vpop.f32.mrf.mxu0
  %v350 = vadd.f32 0.0, %v349
  %v351 = vpop.f32.mrf.mxu0
  %352 = vdwg.mxu0
  %v353 = vpack.c.bf16 %v350, %v347
  %v355 = vlaneseq
  %v356 = vshrl.u32 %v355, 7
  %v357 = vsub.s32 0, %v356
  %v358 = vrot.slane %v229, %v357
  %v364 = vunpack.c.l.b16 %v225
  %v365 = vunpack.c.l.b16 %v226
  %v366 = vunpack.c.l.b16 %v227
  %v367 = vunpack.c.l.b16 %v228
  %v368 = vpack.c.b16 %v365, %v364
  %v369 = vpack.c.b16 %v367, %v366
  %v373 = vsel %vm109, %v353, 0
  %375 = vmatprep.subr.bf16.mxu0 0
  %376 = vmatpush1.bf16.msra.mxu0 0
  %377 = vmatprep.subr.bf16.mxu0 0
  %378 = vmatpush1.bf16.msra.mxu0 0
  %379 = vmatprep.subr.bf16.mxu0 0
  %380 = vmatpush1.bf16.msra.mxu0 0
  %381 = vmatprep.subr.bf16.mxu0 0
  %382 = vmatpush1.bf16.msra.mxu0 0
  %383 = vmatprep.subr.bf16.mxu0 0
  %384 = vmatpush1.bf16.msra.mxu0 0
  %385 = vmatprep.subr.bf16.mxu0 0
  %386 = vmatpush1.bf16.msra.mxu0 0
  %387 = vmatprep.subr.bf16.mxu0 0
  %388 = vmatpush1.bf16.msra.mxu0 %v369
  %389 = vmatprep.subr.bf16.mxu0 0
  %390 = vmatpush1.bf16.msra.mxu0 %v368
  %391 = vmatprep.subr.bf16.mxu0 0
  %392 = vmatpush2.bf16.msra.mxu0 0
  %393 = vmatprep.subr.bf16.mxu0 0
  %394 = vmatpush2.bf16.msra.mxu0 0
  %395 = vmatprep.subr.bf16.mxu0 0
  %396 = vmatpush2.bf16.msra.mxu0 0
  %397 = vmatprep.subr.bf16.mxu0 0
  %398 = vmatpush2.bf16.msra.mxu0 0
  %399 = vmatprep.subr.bf16.mxu0 0
  %400 = vmatpush2.bf16.msra.mxu0 0
  %401 = vmatprep.subr.bf16.mxu0 0
  %402 = vmatpush2.bf16.msra.mxu0 0
  %403 = vmatprep.subr.bf16.mxu0 0
  %404 = vmatpush2.bf16.msra.mxu0 0
  %405 = vmatprep.subr.bf16.mxu0 0
  %406 = vmatpush2.bf16.msra.mxu0 0
  %407 = vmatprep.mubr.bf16.mxu0 0
  %408 = vmatmul.mubr.bf16.gmra.mxu0 %v373
  %v409 = vpop.f32.mrf.mxu0
  %v410 = vadd.f32 %v358, %v409
  %v411 = vpop.f32.mrf.mxu0
  %v412 = vpop.f32.mrf.mxu0
  %v413 = vadd.f32 %v358, %v412
  %v414 = vpop.f32.mrf.mxu0
  %415 = vdwg.mxu0
  %v416 = vld [vmem:[%s17] sm:$0xf]
  %v417 = vld [vmem:[%s17 + $0x4] sm:$0xf]
  %v418 = vld [vmem:[%s17 + $0x8] sm:$0xf]
  %v419 = vld [vmem:[%s17 + $0xc] sm:$0xf]
  %v420 = vld [vmem:[%s18] sm:$0xf]
  %v421 = vld [vmem:[%s18 + $0x4] sm:$0xf]
  %v422 = vld [vmem:[%s18 + $0x8] sm:$0xf]
  %v423 = vld [vmem:[%s18 + $0xc] sm:$0xf]
  %v424 = vld [vmem:[%s19] sm:$0x1]
  %v425 = vld [vmem:[%s20] sm:$0x1]
  %v426 = vpack.c.bf16 %v413, %v410
  %v428 = vlaneseq
  %v429 = vshrl.u32 %v428, 7
  %v430 = vsub.s32 0, %v429
  %v431 = vrot.slane %v424, %v430
  %v437 = vunpack.c.l.b16 %v416
  %v438 = vunpack.c.l.b16 %v417
  %v439 = vunpack.c.l.b16 %v418
  %v440 = vunpack.c.l.b16 %v419
  %v441 = vpack.c.b16 %v438, %v437
  %v442 = vpack.c.b16 %v440, %v439
  %v446 = vsel %vm109, %v426, 0
  %448 = vmatprep.subr.bf16.mxu0 0
  %449 = vmatpush1.bf16.msra.mxu0 0
  %450 = vmatprep.subr.bf16.mxu0 0
  %451 = vmatpush1.bf16.msra.mxu0 0
  %452 = vmatprep.subr.bf16.mxu0 0
  %453 = vmatpush1.bf16.msra.mxu0 0
  %454 = vmatprep.subr.bf16.mxu0 0
  %455 = vmatpush1.bf16.msra.mxu0 0
  %456 = vmatprep.subr.bf16.mxu0 0
  %457 = vmatpush1.bf16.msra.mxu0 0
  %458 = vmatprep.subr.bf16.mxu0 0
  %459 = vmatpush1.bf16.msra.mxu0 0
  %460 = vmatprep.subr.bf16.mxu0 0
  %461 = vmatpush1.bf16.msra.mxu0 %v442
  %462 = vmatprep.subr.bf16.mxu0 0
  %463 = vmatpush1.bf16.msra.mxu0 %v441
  %464 = vmatprep.subr.bf16.mxu0 0
  %465 = vmatpush2.bf16.msra.mxu0 0
  %466 = vmatprep.subr.bf16.mxu0 0
  %467 = vmatpush2.bf16.msra.mxu0 0
  %468 = vmatprep.subr.bf16.mxu0 0
  %469 = vmatpush2.bf16.msra.mxu0 0
  %470 = vmatprep.subr.bf16.mxu0 0
  %471 = vmatpush2.bf16.msra.mxu0 0
  %472 = vmatprep.subr.bf16.mxu0 0
  %473 = vmatpush2.bf16.msra.mxu0 0
  %474 = vmatprep.subr.bf16.mxu0 0
  %475 = vmatpush2.bf16.msra.mxu0 0
  %476 = vmatprep.subr.bf16.mxu0 0
  %477 = vmatpush2.bf16.msra.mxu0 0
  %478 = vmatprep.subr.bf16.mxu0 0
  %479 = vmatpush2.bf16.msra.mxu0 0
  %480 = vmatprep.mubr.bf16.mxu0 0
  %481 = vmatmul.mubr.bf16.gmra.mxu0 %v446
  %v482 = vpop.f32.mrf.mxu0
  %v483 = vadd.f32 %v431, %v482
  %v484 = vpop.f32.mrf.mxu0
  %v485 = vpop.f32.mrf.mxu0
  %v486 = vadd.f32 %v431, %v485
  %v487 = vpop.f32.mrf.mxu0
  %488 = vdwg.mxu0
  %v493 = vunpack.c.l.b16 %v420
  %v494 = vunpack.c.l.b16 %v421
  %v495 = vunpack.c.l.b16 %v422
  %v496 = vunpack.c.l.b16 %v423
  %v497 = vpack.c.b16 %v494, %v493
  %v498 = vpack.c.b16 %v496, %v495
  %501 = vmatprep.subr.bf16.mxu0 0
  %502 = vmatpush1.bf16.msra.mxu0 0
  %503 = vmatprep.subr.bf16.mxu0 0
  %504 = vmatpush1.bf16.msra.mxu0 0
  %505 = vmatprep.subr.bf16.mxu0 0
  %506 = vmatpush1.bf16.msra.mxu0 0
  %507 = vmatprep.subr.bf16.mxu0 0
  %508 = vmatpush1.bf16.msra.mxu0 0
  %509 = vmatprep.subr.bf16.mxu0 0
  %510 = vmatpush1.bf16.msra.mxu0 0
  %511 = vmatprep.subr.bf16.mxu0 0
  %512 = vmatpush1.bf16.msra.mxu0 0
  %513 = vmatprep.subr.bf16.mxu0 0
  %514 = vmatpush1.bf16.msra.mxu0 %v498
  %515 = vmatprep.subr.bf16.mxu0 0
  %516 = vmatpush1.bf16.msra.mxu0 %v497
  %517 = vmatprep.subr.bf16.mxu0 0
  %518 = vmatpush2.bf16.msra.mxu0 0
  %519 = vmatprep.subr.bf16.mxu0 0
  %520 = vmatpush2.bf16.msra.mxu0 0
  %521 = vmatprep.subr.bf16.mxu0 0
  %522 = vmatpush2.bf16.msra.mxu0 0
  %523 = vmatprep.subr.bf16.mxu0 0
  %524 = vmatpush2.bf16.msra.mxu0 0
  %525 = vmatprep.subr.bf16.mxu0 0
  %526 = vmatpush2.bf16.msra.mxu0 0
  %527 = vmatprep.subr.bf16.mxu0 0
  %528 = vmatpush2.bf16.msra.mxu0 0
  %529 = vmatprep.subr.bf16.mxu0 0
  %530 = vmatpush2.bf16.msra.mxu0 0
  %531 = vmatprep.subr.bf16.mxu0 0
  %532 = vmatpush2.bf16.msra.mxu0 0
  %533 = vmatprep.mubr.bf16.mxu0 0
  %534 = vmatmul.mubr.bf16.gmra.mxu0 %v111
  %v535 = vpop.f32.mrf.mxu0
  %v536 = vadd.f32 0.0, %v535
  %v537 = vpop.f32.mrf.mxu0
  %v538 = vpop.f32.mrf.mxu0
  %v539 = vadd.f32 0.0, %v538
  %v540 = vpop.f32.mrf.mxu0
  %541 = vdwg.mxu0
  %v542 = vadd.f32 %v483, %v536
  %v543 = vadd.f32 %v486, %v539
  %v544 = vxor.u32 %v542, 2147483648
  %v545 = vxor.u32 %v543, 2147483648
  %v546 = vmul.f32 %v544, 1.442695
  %v547 = vpow.pop %v546
  %v548 = vmul.f32 %v545, 1.442695
  %v549 = vpow.pop %v548
  %v550 = vadd.f32 %v547, 1.0
  %v551 = vadd.f32 %v549, 1.0
  %v552 = vrcp.pop %v550
  %v553 = vmul.f32 1.0, %v552
  %v554 = vrcp.pop %v551
  %v555 = vmul.f32 1.0, %v554
  %v557 = vlaneseq
  %v558 = vshrl.u32 %v557, 7
  %v559 = vsub.s32 0, %v558
  %v560 = vrot.slane %v425, %v559
  %561 = vrot.lane.b32.xlu0 %v560, 64
  %v562 = vpop.permute.xlu0 %561
  %v564 = vadd.f32 %v536, %v562
  %v565 = vadd.f32 %v539, %v562
  %568 = vrot.lane.b32.xlu0 %v564, 64
  %v569 = vpop.permute.xlu0 %568
  %570 = vrot.lane.b32.xlu0 %v565, 64
  %v571 = vpop.permute.xlu0 %570
  %v574 = vmul.f32 %v553, %v569
  %v575 = vmul.f32 %v555, %v571
  %578 = vrot.lane.b32.xlu0 %v574, 64
  %v579 = vpop.permute.xlu0 %578
  %580 = vrot.lane.b32.xlu0 %v575, 64
  %v581 = vpop.permute.xlu0 %580
  %v584 = vadd.f32 %v483, %v579
  %v585 = vadd.f32 %v486, %v581
  %v586 = vtanh.pop %v584
  %v587 = vtanh.pop %v585
  %v588 = vsub.f32 1.0, %v553
  %v589 = vsub.f32 1.0, %v555
  %592 = vrot.lane.b32.xlu0 %v586, 96
  %v593 = vpop.permute.xlu0 %592
  %594 = vrot.lane.b32.xlu0 %v587, 96
  %v595 = vpop.permute.xlu0 %594
  %v598 = vmul.f32 %v588, %v593
  %v599 = vmul.f32 %v589, %v595
  %602 = vrot.lane.b32.xlu0 %v81, 32
  %v603 = vpop.permute.xlu0 %602
  %604 = vrot.lane.b32.xlu0 %v82, 32
  %v605 = vpop.permute.xlu0 %604
  %v608 = vmul.f32 %v553, %v603
  %v609 = vmul.f32 %v555, %v605
  %v610 = vadd.f32 %v598, %v608
  %v611 = vadd.f32 %v599, %v609
  %v612 = vld [vmem:[%s13] sm:$0xf]
  %v613 = vld [vmem:[%s13 + $0x4] sm:$0xf]
  %v614 = vld [vmem:[%s13 + $0x8] sm:$0xf]
  %v615 = vld [vmem:[%s13 + $0xc] sm:$0xf]
  %v616 = vpack.c.bf16 %v611, %v610
  %v617 = vld [vmem:[%s14] sm:$0x1]
  %v619 = vlaneseq
  %v620 = vshrl.u32 %v619, 7
  %v621 = vsub.s32 0, %v620
  %v622 = vrot.slane %v617, %v621
  %625 = vrot.lane.b32.xlu0 %v616, 96
  %v626 = vpop.permute.xlu0 %625
  %v631 = vunpack.c.l.b16 %v612
  %v632 = vunpack.c.l.b16 %v613
  %v633 = vunpack.c.l.b16 %v614
  %v634 = vunpack.c.l.b16 %v615
  %v635 = vpack.c.b16 %v632, %v631
  %v636 = vpack.c.b16 %v634, %v633
  %v640 = vsel %vm109, %v626, 0
  %642 = vmatprep.subr.bf16.mxu0 0
  %643 = vmatpush1.bf16.msra.mxu0 0
  %644 = vmatprep.subr.bf16.mxu0 0
  %645 = vmatpush1.bf16.msra.mxu0 0
  %646 = vmatprep.subr.bf16.mxu0 0
  %647 = vmatpush1.bf16.msra.mxu0 0
  %648 = vmatprep.subr.bf16.mxu0 0
  %649 = vmatpush1.bf16.msra.mxu0 0
  %650 = vmatprep.subr.bf16.mxu0 0
  %651 = vmatpush1.bf16.msra.mxu0 0
  %652 = vmatprep.subr.bf16.mxu0 0
  %653 = vmatpush1.bf16.msra.mxu0 0
  %654 = vmatprep.subr.bf16.mxu0 0
  %655 = vmatpush1.bf16.msra.mxu0 %v636
  %656 = vmatprep.subr.bf16.mxu0 0
  %657 = vmatpush1.bf16.msra.mxu0 %v635
  %658 = vmatprep.subr.bf16.mxu0 0
  %659 = vmatpush2.bf16.msra.mxu0 0
  %660 = vmatprep.subr.bf16.mxu0 0
  %661 = vmatpush2.bf16.msra.mxu0 0
  %662 = vmatprep.subr.bf16.mxu0 0
  %663 = vmatpush2.bf16.msra.mxu0 0
  %664 = vmatprep.subr.bf16.mxu0 0
  %665 = vmatpush2.bf16.msra.mxu0 0
  %666 = vmatprep.subr.bf16.mxu0 0
  %667 = vmatpush2.bf16.msra.mxu0 0
  %668 = vmatprep.subr.bf16.mxu0 0
  %669 = vmatpush2.bf16.msra.mxu0 0
  %670 = vmatprep.subr.bf16.mxu0 0
  %671 = vmatpush2.bf16.msra.mxu0 0
  %672 = vmatprep.subr.bf16.mxu0 0
  %673 = vmatpush2.bf16.msra.mxu0 0
  %674 = vmatprep.mubr.bf16.mxu0 0
  %675 = vmatmul.mubr.bf16.gmra.mxu0 %v640
  %v676 = vpop.f32.mrf.mxu0
  %v677 = vadd.f32 %v622, %v676
  %v678 = vpop.f32.mrf.mxu0
  %v679 = vpop.f32.mrf.mxu0
  %v680 = vadd.f32 %v622, %v679
  %v681 = vpop.f32.mrf.mxu0
  %682 = vdwg.mxu0
  %v683 = vpack.c.bf16 %v680, %v677
  %v684 = vld [vmem:[%s11] sm:$0xf]
  %v685 = vld [vmem:[%s11 + $0x4] sm:$0xf]
  %v686 = vld [vmem:[%s11 + $0x8] sm:$0xf]
  %v687 = vld [vmem:[%s11 + $0xc] sm:$0xf]
  %v688 = vld [vmem:[%s12] sm:$0x1]
  %v689 = vld [vmem:[%s15] sm:$0xf]
  %v690 = vld [vmem:[%s15 + $0x4] sm:$0xf]
  %v691 = vld [vmem:[%s15 + $0x8] sm:$0xf]
  %v692 = vld [vmem:[%s15 + $0xc] sm:$0xf]
  %v693 = vld [vmem:[%s16] sm:$0x1]
  %v694 = vld [vmem:[%s3] sm:$0x3]
  %v695 = vld [vmem:[%s4] sm:$0x3]
  %v696 = vpack.c.bf16 %v695, %v695
  %v698 = vlaneseq
  %v699 = vshrl.u32 %v698, 7
  %v700 = vsub.s32 0, %v699
  %v701 = vrot.slane %v688, %v700
  %v707 = vunpack.c.l.b16 %v684
  %v708 = vunpack.c.l.b16 %v685
  %v709 = vunpack.c.l.b16 %v686
  %v710 = vunpack.c.l.b16 %v687
  %v711 = vpack.c.b16 %v708, %v707
  %v712 = vpack.c.b16 %v710, %v709
  %v716 = vsel %vm109, %v696, 0
  %718 = vmatprep.subr.bf16.mxu0 0
  %719 = vmatpush1.bf16.msra.mxu0 0
  %720 = vmatprep.subr.bf16.mxu0 0
  %721 = vmatpush1.bf16.msra.mxu0 0
  %722 = vmatprep.subr.bf16.mxu0 0
  %723 = vmatpush1.bf16.msra.mxu0 0
  %724 = vmatprep.subr.bf16.mxu0 0
  %725 = vmatpush1.bf16.msra.mxu0 0
  %726 = vmatprep.subr.bf16.mxu0 0
  %727 = vmatpush1.bf16.msra.mxu0 0
  %728 = vmatprep.subr.bf16.mxu0 0
  %729 = vmatpush1.bf16.msra.mxu0 0
  %730 = vmatprep.subr.bf16.mxu0 0
  %731 = vmatpush1.bf16.msra.mxu0 %v712
  %732 = vmatprep.subr.bf16.mxu0 0
  %733 = vmatpush1.bf16.msra.mxu0 %v711
  %734 = vmatprep.subr.bf16.mxu0 0
  %735 = vmatpush2.bf16.msra.mxu0 0
  %736 = vmatprep.subr.bf16.mxu0 0
  %737 = vmatpush2.bf16.msra.mxu0 0
  %738 = vmatprep.subr.bf16.mxu0 0
  %739 = vmatpush2.bf16.msra.mxu0 0
  %740 = vmatprep.subr.bf16.mxu0 0
  %741 = vmatpush2.bf16.msra.mxu0 0
  %742 = vmatprep.subr.bf16.mxu0 0
  %743 = vmatpush2.bf16.msra.mxu0 0
  %744 = vmatprep.subr.bf16.mxu0 0
  %745 = vmatpush2.bf16.msra.mxu0 0
  %746 = vmatprep.subr.bf16.mxu0 0
  %747 = vmatpush2.bf16.msra.mxu0 0
  %748 = vmatprep.subr.bf16.mxu0 0
  %749 = vmatpush2.bf16.msra.mxu0 0
  %750 = vmatprep.mubr.bf16.mxu0 0
  %751 = vmatmul.mubr.bf16.gmra.mxu0 %v716
  %v752 = vpop.f32.mrf.mxu0
  %v753 = vadd.f32 %v701, %v752
  %v754 = vpop.f32.mrf.mxu0
  %v755 = vpop.f32.mrf.mxu0
  %v756 = vpop.f32.mrf.mxu0
  %757 = vdwg.mxu0
  %v758 = vpack.c.bf16 %v753, %v753
  %v760 = vsel %vm109, %v758, 0
  %v763 = vsel %vm109, %v683, 0
  %765 = vmatprep.subr.bf16.mxu0 0
  %766 = vmatpush1.bf16.xpose.msra.mxu0 0
  %767 = vmatprep.subr.bf16.mxu0 0
  %768 = vmatpush1.bf16.xpose.msra.mxu0 0
  %769 = vmatprep.subr.bf16.mxu0 0
  %770 = vmatpush1.bf16.xpose.msra.mxu0 0
  %771 = vmatprep.subr.bf16.mxu0 0
  %772 = vmatpush1.bf16.xpose.msra.mxu0 0
  %773 = vmatprep.subr.bf16.mxu0 0
  %774 = vmatpush1.bf16.xpose.msra.mxu0 0
  %775 = vmatprep.subr.bf16.mxu0 0
  %776 = vmatpush1.bf16.xpose.msra.mxu0 0
  %777 = vmatprep.subr.bf16.mxu0 0
  %778 = vmatpush1.bf16.xpose.msra.mxu0 0
  %779 = vmatprep.subr.bf16.mxu0 0
  %780 = vmatpush1.bf16.xpose.msra.mxu0 %v763
  %781 = vmatprep.subr.bf16.mxu0 0
  %782 = vmatpush2.bf16.xpose.msra.mxu0 0
  %783 = vmatprep.subr.bf16.mxu0 0
  %784 = vmatpush2.bf16.xpose.msra.mxu0 0
  %785 = vmatprep.subr.bf16.mxu0 0
  %786 = vmatpush2.bf16.xpose.msra.mxu0 0
  %787 = vmatprep.subr.bf16.mxu0 0
  %788 = vmatpush2.bf16.xpose.msra.mxu0 0
  %789 = vmatprep.subr.bf16.mxu0 0
  %790 = vmatpush2.bf16.xpose.msra.mxu0 0
  %791 = vmatprep.subr.bf16.mxu0 0
  %792 = vmatpush2.bf16.xpose.msra.mxu0 0
  %793 = vmatprep.subr.bf16.mxu0 0
  %794 = vmatpush2.bf16.xpose.msra.mxu0 0
  %795 = vmatprep.subr.bf16.mxu0 0
  %796 = vmatpush2.bf16.xpose.msra.mxu0 0
  %797 = vmatprep.mubr.bf16.mxu0 0
  %798 = vmatmul.mubr.bf16.gmra.mxu0 %v760
  %v799 = vpop.f32.mrf.mxu0
  %v800 = vadd.f32 %v694, %v799
  %v801 = vpop.f32.mrf.mxu0
  %v802 = vpop.f32.mrf.mxu0
  %v803 = vpop.f32.mrf.mxu0
  %804 = vdwg.mxu0
  %vm805 = vcmask 123904
  %v806 = vsel %vm805, %v800, -inf
  %807 = vmax.xlane.f32.xlu0 %v806
  %v808 = vpop.xlane.xlu0 %807
  %v809 = vsub.f32 %v800, %v808
  %v810 = vmul.f32 %v809, 1.442695
  %v811 = vpow.pop %v810
  %v812 = vsel %vm805, %v811, 0.0
  %813 = vadd.xlane.f32.xlu0 %v812
  %v814 = vpop.xlane.xlu0 %813
  %v815 = vrcp.pop %v814
  %v816 = vmul.f32 %v811, %v815
  %v817 = vpack.c.bf16 %v816, %v816
  %819 = vrot.lane.b32.xlu0 %v683, 96
  %v820 = vpop.permute.xlu0 %819
  %vm822 = vcmask 130048
  %v824 = vsel %vm822, %v817, 0
  %826 = vmatprep.subr.bf16.mxu0 0
  %827 = vmatpush1.bf16.msra.mxu0 0
  %828 = vmatprep.subr.bf16.mxu0 0
  %829 = vmatpush1.bf16.msra.mxu0 0
  %830 = vmatprep.subr.bf16.mxu0 0
  %831 = vmatpush1.bf16.msra.mxu0 0
  %832 = vmatprep.subr.bf16.mxu0 0
  %833 = vmatpush1.bf16.msra.mxu0 0
  %834 = vmatprep.subr.bf16.mxu0 0
  %835 = vmatpush1.bf16.msra.mxu0 0
  %836 = vmatprep.subr.bf16.mxu0 0
  %837 = vmatpush1.bf16.msra.mxu0 0
  %838 = vmatprep.subr.bf16.mxu0 0
  %839 = vmatpush1.bf16.msra.mxu0 0
  %840 = vmatprep.subr.bf16.mxu0 0
  %841 = vmatpush1.bf16.msra.mxu0 %v820
  %842 = vmatprep.subr.bf16.mxu0 0
  %843 = vmatpush2.bf16.msra.mxu0 0
  %844 = vmatprep.subr.bf16.mxu0 0
  %845 = vmatpush2.bf16.msra.mxu0 0
  %846 = vmatprep.subr.bf16.mxu0 0
  %847 = vmatpush2.bf16.msra.mxu0 0
  %848 = vmatprep.subr.bf16.mxu0 0
  %849 = vmatpush2.bf16.msra.mxu0 0
  %850 = vmatprep.subr.bf16.mxu0 0
  %851 = vmatpush2.bf16.msra.mxu0 0
  %852 = vmatprep.subr.bf16.mxu0 0
  %853 = vmatpush2.bf16.msra.mxu0 0
  %854 = vmatprep.subr.bf16.mxu0 0
  %855 = vmatpush2.bf16.msra.mxu0 0
  %856 = vmatprep.subr.bf16.mxu0 0
  %857 = vmatpush2.bf16.msra.mxu0 0
  %858 = vmatprep.mubr.bf16.mxu0 0
  %859 = vmatmul.mubr.bf16.gmra.mxu0 %v824
  %v860 = vpop.f32.mrf.mxu0
  %v861 = vadd.f32 0.0, %v860
  %v862 = vpop.f32.mrf.mxu0
  %v863 = vpop.f32.mrf.mxu0
  %v864 = vpop.f32.mrf.mxu0
  %865 = vdwg.mxu0
  %v866 = vpack.c.bf16 %v861, %v861
  %v868 = vlaneseq
  %v869 = vshrl.u32 %v868, 7
  %v870 = vsub.s32 0, %v869
  %v871 = vrot.slane %v693, %v870
  %v877 = vunpack.c.l.b16 %v689
  %v878 = vunpack.c.l.b16 %v690
  %v879 = vunpack.c.l.b16 %v691
  %v880 = vunpack.c.l.b16 %v692
  %v881 = vpack.c.b16 %v878, %v877
  %v882 = vpack.c.b16 %v880, %v879
  %v886 = vsel %vm109, %v866, 0
  %888 = vmatprep.subr.bf16.mxu0 0
  %889 = vmatpush1.bf16.msra.mxu0 0
  %890 = vmatprep.subr.bf16.mxu0 0
  %891 = vmatpush1.bf16.msra.mxu0 0
  %892 = vmatprep.subr.bf16.mxu0 0
  %893 = vmatpush1.bf16.msra.mxu0 0
  %894 = vmatprep.subr.bf16.mxu0 0
  %895 = vmatpush1.bf16.msra.mxu0 0
  %896 = vmatprep.subr.bf16.mxu0 0
  %897 = vmatpush1.bf16.msra.mxu0 0
  %898 = vmatprep.subr.bf16.mxu0 0
  %899 = vmatpush1.bf16.msra.mxu0 0
  %900 = vmatprep.subr.bf16.mxu0 0
  %901 = vmatpush1.bf16.msra.mxu0 %v882
  %902 = vmatprep.subr.bf16.mxu0 0
  %903 = vmatpush1.bf16.msra.mxu0 %v881
  %904 = vmatprep.subr.bf16.mxu0 0
  %905 = vmatpush2.bf16.msra.mxu0 0
  %906 = vmatprep.subr.bf16.mxu0 0
  %907 = vmatpush2.bf16.msra.mxu0 0
  %908 = vmatprep.subr.bf16.mxu0 0
  %909 = vmatpush2.bf16.msra.mxu0 0
  %910 = vmatprep.subr.bf16.mxu0 0
  %911 = vmatpush2.bf16.msra.mxu0 0
  %912 = vmatprep.subr.bf16.mxu0 0
  %913 = vmatpush2.bf16.msra.mxu0 0
  %914 = vmatprep.subr.bf16.mxu0 0
  %915 = vmatpush2.bf16.msra.mxu0 0
  %916 = vmatprep.subr.bf16.mxu0 0
  %917 = vmatpush2.bf16.msra.mxu0 0
  %918 = vmatprep.subr.bf16.mxu0 0
  %919 = vmatpush2.bf16.msra.mxu0 0
  %920 = vmatprep.mubr.bf16.mxu0 0
  %921 = vmatmul.mubr.bf16.gmra.mxu0 %v886
  %v922 = vpop.f32.mrf.mxu0
  %v923 = vadd.f32 %v871, %v922
  %v924 = vpop.f32.mrf.mxu0
  %v925 = vpop.f32.mrf.mxu0
  %v926 = vpop.f32.mrf.mxu0
  %927 = vdwg.mxu0
  %v928 = vld [vmem:[%s21] sm:$0xf]
  %v929 = vld [vmem:[%s21 + $0x4] sm:$0xf]
  %v930 = vld [vmem:[%s21 + $0x8] sm:$0xf]
  %v931 = vld [vmem:[%s21 + $0xc] sm:$0xf]
  %v932 = vld [vmem:[%s22] sm:$0xf]
  %v933 = vld [vmem:[%s22 + $0x4] sm:$0xf]
  %v934 = vld [vmem:[%s22 + $0x8] sm:$0xf]
  %v935 = vld [vmem:[%s22 + $0xc] sm:$0xf]
  %v936 = vld [vmem:[%s23] sm:$0x1]
  %v937 = vld [vmem:[%s24] sm:$0x1]
  %v938 = vpack.c.bf16 %v923, %v923
  %v940 = vlaneseq
  %v941 = vshrl.u32 %v940, 7
  %v942 = vsub.s32 0, %v941
  %v943 = vrot.slane %v936, %v942
  %v949 = vunpack.c.l.b16 %v928
  %v950 = vunpack.c.l.b16 %v929
  %v951 = vunpack.c.l.b16 %v930
  %v952 = vunpack.c.l.b16 %v931
  %v953 = vpack.c.b16 %v950, %v949
  %v954 = vpack.c.b16 %v952, %v951
  %v958 = vsel %vm109, %v938, 0
  %960 = vmatprep.subr.bf16.mxu0 0
  %961 = vmatpush1.bf16.msra.mxu0 0
  %962 = vmatprep.subr.bf16.mxu0 0
  %963 = vmatpush1.bf16.msra.mxu0 0
  %964 = vmatprep.subr.bf16.mxu0 0
  %965 = vmatpush1.bf16.msra.mxu0 0
  %966 = vmatprep.subr.bf16.mxu0 0
  %967 = vmatpush1.bf16.msra.mxu0 0
  %968 = vmatprep.subr.bf16.mxu0 0
  %969 = vmatpush1.bf16.msra.mxu0 0
  %970 = vmatprep.subr.bf16.mxu0 0
  %971 = vmatpush1.bf16.msra.mxu0 0
  %972 = vmatprep.subr.bf16.mxu0 0
  %973 = vmatpush1.bf16.msra.mxu0 %v954
  %974 = vmatprep.subr.bf16.mxu0 0
  %975 = vmatpush1.bf16.msra.mxu0 %v953
  %976 = vmatprep.subr.bf16.mxu0 0
  %977 = vmatpush2.bf16.msra.mxu0 0
  %978 = vmatprep.subr.bf16.mxu0 0
  %979 = vmatpush2.bf16.msra.mxu0 0
  %980 = vmatprep.subr.bf16.mxu0 0
  %981 = vmatpush2.bf16.msra.mxu0 0
  %982 = vmatprep.subr.bf16.mxu0 0
  %983 = vmatpush2.bf16.msra.mxu0 0
  %984 = vmatprep.subr.bf16.mxu0 0
  %985 = vmatpush2.bf16.msra.mxu0 0
  %986 = vmatprep.subr.bf16.mxu0 0
  %987 = vmatpush2.bf16.msra.mxu0 0
  %988 = vmatprep.subr.bf16.mxu0 0
  %989 = vmatpush2.bf16.msra.mxu0 0
  %990 = vmatprep.subr.bf16.mxu0 0
  %991 = vmatpush2.bf16.msra.mxu0 0
  %992 = vmatprep.mubr.bf16.mxu0 0
  %993 = vmatmul.mubr.bf16.gmra.mxu0 %v958
  %v994 = vpop.f32.mrf.mxu0
  %v995 = vadd.f32 %v943, %v994
  %v996 = vpop.f32.mrf.mxu0
  %v997 = vpop.f32.mrf.mxu0
  %v998 = vpop.f32.mrf.mxu0
  %999 = vdwg.mxu0
  %v1004 = vunpack.c.l.b16 %v932
  %v1005 = vunpack.c.l.b16 %v933
  %v1006 = vunpack.c.l.b16 %v934
  %v1007 = vunpack.c.l.b16 %v935
  %v1008 = vpack.c.b16 %v1005, %v1004
  %v1009 = vpack.c.b16 %v1007, %v1006
  %1012 = vmatprep.subr.bf16.mxu0 0
  %1013 = vmatpush1.bf16.msra.mxu0 0
  %1014 = vmatprep.subr.bf16.mxu0 0
  %1015 = vmatpush1.bf16.msra.mxu0 0
  %1016 = vmatprep.subr.bf16.mxu0 0
  %1017 = vmatpush1.bf16.msra.mxu0 0
  %1018 = vmatprep.subr.bf16.mxu0 0
  %1019 = vmatpush1.bf16.msra.mxu0 0
  %1020 = vmatprep.subr.bf16.mxu0 0
  %1021 = vmatpush1.bf16.msra.mxu0 0
  %1022 = vmatprep.subr.bf16.mxu0 0
  %1023 = vmatpush1.bf16.msra.mxu0 0
  %1024 = vmatprep.subr.bf16.mxu0 0
  %1025 = vmatpush1.bf16.msra.mxu0 %v1009
  %1026 = vmatprep.subr.bf16.mxu0 0
  %1027 = vmatpush1.bf16.msra.mxu0 %v1008
  %1028 = vmatprep.subr.bf16.mxu0 0
  %1029 = vmatpush2.bf16.msra.mxu0 0
  %1030 = vmatprep.subr.bf16.mxu0 0
  %1031 = vmatpush2.bf16.msra.mxu0 0
  %1032 = vmatprep.subr.bf16.mxu0 0
  %1033 = vmatpush2.bf16.msra.mxu0 0
  %1034 = vmatprep.subr.bf16.mxu0 0
  %1035 = vmatpush2.bf16.msra.mxu0 0
  %1036 = vmatprep.subr.bf16.mxu0 0
  %1037 = vmatpush2.bf16.msra.mxu0 0
  %1038 = vmatprep.subr.bf16.mxu0 0
  %1039 = vmatpush2.bf16.msra.mxu0 0
  %1040 = vmatprep.subr.bf16.mxu0 0
  %1041 = vmatpush2.bf16.msra.mxu0 0
  %1042 = vmatprep.subr.bf16.mxu0 0
  %1043 = vmatpush2.bf16.msra.mxu0 0
  %1044 = vmatprep.mubr.bf16.mxu0 0
  %1045 = vmatmul.mubr.bf16.gmra.mxu0 %v716
  %v1046 = vpop.f32.mrf.mxu0
  %v1047 = vadd.f32 0.0, %v1046
  %v1048 = vpop.f32.mrf.mxu0
  %v1049 = vpop.f32.mrf.mxu0
  %v1050 = vpop.f32.mrf.mxu0
  %1051 = vdwg.mxu0
  %v1052 = vadd.f32 %v995, %v1047
  %v1053 = vxor.u32 %v1052, 2147483648
  %v1054 = vmul.f32 %v1053, 1.442695
  %v1055 = vpow.pop %v1054
  %v1056 = vadd.f32 %v1055, 1.0
  %v1057 = vrcp.pop %v1056
  %v1058 = vmul.f32 1.0, %v1057
  %v1060 = vlaneseq
  %v1061 = vshrl.u32 %v1060, 7
  %v1062 = vsub.s32 0, %v1061
  %v1063 = vrot.slane %v937, %v1062
  %1064 = vrot.lane.b32.xlu0 %v1063, 64
  %v1065 = vpop.permute.xlu0 %1064
  %v1067 = vadd.f32 %v1047, %v1065
  %1069 = vrot.lane.b32.xlu0 %v1067, 64
  %v1070 = vpop.permute.xlu0 %1069
  %v1072 = vmul.f32 %v1058, %v1070
  %1074 = vrot.lane.b32.xlu0 %v1072, 64
  %v1075 = vpop.permute.xlu0 %1074
  %v1077 = vadd.f32 %v995, %v1075
  %v1078 = vtanh.pop %v1077
  %v1079 = vsub.f32 1.0, %v1058
  %1081 = vrot.lane.b32.xlu0 %v1078, 96
  %v1082 = vpop.permute.xlu0 %1081
  %v1084 = vmul.f32 %v1079, %v1082
  %1086 = vrot.lane.b32.xlu0 %v695, 32
  %v1087 = vpop.permute.xlu0 %1086
  %v1089 = vmul.f32 %v1058, %v1087
  %v1090 = vadd.f32 %v1084, %v1089
  %1092 = vrot.lane.b32.xlu0 %v1090, 96
  %v1093 = vpop.permute.xlu0 %1092
  %vm1095 = vcmask 254976
  %1096 = vst.msk [vmem:[%s25] sm:$0x3] %vm1095, %v1093
  %v1097 = vpack.c.bf16 %v1090, %v1090
  %1099 = vrot.lane.b32.xlu0 %v1097, 96
  %v1100 = vpop.permute.xlu0 %1099
  %v1102 = vsel %vm109, %v1100, 0
  %1104 = vmatprep.subr.bf16.mxu0 0
  %1105 = vmatpush1.bf16.msra.mxu0 0
  %1106 = vmatprep.subr.bf16.mxu0 0
  %1107 = vmatpush1.bf16.msra.mxu0 0
  %1108 = vmatprep.subr.bf16.mxu0 0
  %1109 = vmatpush1.bf16.msra.mxu0 0
  %1110 = vmatprep.subr.bf16.mxu0 0
  %1111 = vmatpush1.bf16.msra.mxu0 0
  %1112 = vmatprep.subr.bf16.mxu0 0
  %1113 = vmatpush1.bf16.msra.mxu0 0
  %1114 = vmatprep.subr.bf16.mxu0 0
  %1115 = vmatpush1.bf16.msra.mxu0 0
  %1116 = vmatprep.subr.bf16.mxu0 0
  %1117 = vmatpush1.bf16.msra.mxu0 %v712
  %1118 = vmatprep.subr.bf16.mxu0 0
  %1119 = vmatpush1.bf16.msra.mxu0 %v711
  %1120 = vmatprep.subr.bf16.mxu0 0
  %1121 = vmatpush2.bf16.msra.mxu0 0
  %1122 = vmatprep.subr.bf16.mxu0 0
  %1123 = vmatpush2.bf16.msra.mxu0 0
  %1124 = vmatprep.subr.bf16.mxu0 0
  %1125 = vmatpush2.bf16.msra.mxu0 0
  %1126 = vmatprep.subr.bf16.mxu0 0
  %1127 = vmatpush2.bf16.msra.mxu0 0
  %1128 = vmatprep.subr.bf16.mxu0 0
  %1129 = vmatpush2.bf16.msra.mxu0 0
  %1130 = vmatprep.subr.bf16.mxu0 0
  %1131 = vmatpush2.bf16.msra.mxu0 0
  %1132 = vmatprep.subr.bf16.mxu0 0
  %1133 = vmatpush2.bf16.msra.mxu0 0
  %1134 = vmatprep.subr.bf16.mxu0 0
  %1135 = vmatpush2.bf16.msra.mxu0 0
  %1136 = vmatprep.mubr.bf16.mxu0 0
  %1137 = vmatmul.mubr.bf16.gmra.mxu0 %v1102
  %v1138 = vpop.f32.mrf.mxu0
  %v1139 = vadd.f32 %v701, %v1138
  %v1140 = vpop.f32.mrf.mxu0
  %v1141 = vpop.f32.mrf.mxu0
  %v1142 = vpop.f32.mrf.mxu0
  %1143 = vdwg.mxu0
  %v1144 = vpack.c.bf16 %v1139, %v1139
  %v1146 = vsel %vm109, %v1144, 0
  %1148 = vmatprep.subr.bf16.mxu0 0
  %1149 = vmatpush1.bf16.xpose.msra.mxu0 0
  %1150 = vmatprep.subr.bf16.mxu0 0
  %1151 = vmatpush1.bf16.xpose.msra.mxu0 0
  %1152 = vmatprep.subr.bf16.mxu0 0
  %1153 = vmatpush1.bf16.xpose.msra.mxu0 0
  %1154 = vmatprep.subr.bf16.mxu0 0
  %1155 = vmatpush1.bf16.xpose.msra.mxu0 0
  %1156 = vmatprep.subr.bf16.mxu0 0
  %1157 = vmatpush1.bf16.xpose.msra.mxu0 0
  %1158 = vmatprep.subr.bf16.mxu0 0
  %1159 = vmatpush1.bf16.xpose.msra.mxu0 0
  %1160 = vmatprep.subr.bf16.mxu0 0
  %1161 = vmatpush1.bf16.xpose.msra.mxu0 0
  %1162 = vmatprep.subr.bf16.mxu0 0
  %1163 = vmatpush1.bf16.xpose.msra.mxu0 %v763
  %1164 = vmatprep.subr.bf16.mxu0 0
  %1165 = vmatpush2.bf16.xpose.msra.mxu0 0
  %1166 = vmatprep.subr.bf16.mxu0 0
  %1167 = vmatpush2.bf16.xpose.msra.mxu0 0
  %1168 = vmatprep.subr.bf16.mxu0 0
  %1169 = vmatpush2.bf16.xpose.msra.mxu0 0
  %1170 = vmatprep.subr.bf16.mxu0 0
  %1171 = vmatpush2.bf16.xpose.msra.mxu0 0
  %1172 = vmatprep.subr.bf16.mxu0 0
  %1173 = vmatpush2.bf16.xpose.msra.mxu0 0
  %1174 = vmatprep.subr.bf16.mxu0 0
  %1175 = vmatpush2.bf16.xpose.msra.mxu0 0
  %1176 = vmatprep.subr.bf16.mxu0 0
  %1177 = vmatpush2.bf16.xpose.msra.mxu0 0
  %1178 = vmatprep.subr.bf16.mxu0 0
  %1179 = vmatpush2.bf16.xpose.msra.mxu0 0
  %1180 = vmatprep.mubr.bf16.mxu0 0
  %1181 = vmatmul.mubr.bf16.gmra.mxu0 %v1146
  %v1182 = vpop.f32.mrf.mxu0
  %v1183 = vadd.f32 %v694, %v1182
  %v1184 = vpop.f32.mrf.mxu0
  %v1185 = vpop.f32.mrf.mxu0
  %v1186 = vpop.f32.mrf.mxu0
  %1187 = vdwg.mxu0
  %v1188 = vsel %vm805, %v1183, -inf
  %1189 = vmax.xlane.f32.xlu0 %v1188
  %v1190 = vpop.xlane.xlu0 %1189
  %v1191 = vsub.f32 %v1183, %v1190
  %v1192 = vmul.f32 %v1191, 1.442695
  %v1193 = vpow.pop %v1192
  %v1194 = vsel %vm805, %v1193, 0.0
  %1195 = vadd.xlane.f32.xlu0 %v1194
  %v1196 = vpop.xlane.xlu0 %1195
  %v1197 = vrcp.pop %v1196
  %v1198 = vmul.f32 %v1193, %v1197
  %v1199 = vpack.c.bf16 %v1198, %v1198
  %v1201 = vsel %vm822, %v1199, 0
  %1203 = vmatprep.subr.bf16.mxu0 0
  %1204 = vmatpush1.bf16.msra.mxu0 0
  %1205 = vmatprep.subr.bf16.mxu0 0
  %1206 = vmatpush1.bf16.msra.mxu0 0
  %1207 = vmatprep.subr.bf16.mxu0 0
  %1208 = vmatpush1.bf16.msra.mxu0 0
  %1209 = vmatprep.subr.bf16.mxu0 0
  %1210 = vmatpush1.bf16.msra.mxu0 0
  %1211 = vmatprep.subr.bf16.mxu0 0
  %1212 = vmatpush1.bf16.msra.mxu0 0
  %1213 = vmatprep.subr.bf16.mxu0 0
  %1214 = vmatpush1.bf16.msra.mxu0 0
  %1215 = vmatprep.subr.bf16.mxu0 0
  %1216 = vmatpush1.bf16.msra.mxu0 0
  %1217 = vmatprep.subr.bf16.mxu0 0
  %1218 = vmatpush1.bf16.msra.mxu0 %v820
  %1219 = vmatprep.subr.bf16.mxu0 0
  %1220 = vmatpush2.bf16.msra.mxu0 0
  %1221 = vmatprep.subr.bf16.mxu0 0
  %1222 = vmatpush2.bf16.msra.mxu0 0
  %1223 = vmatprep.subr.bf16.mxu0 0
  %1224 = vmatpush2.bf16.msra.mxu0 0
  %1225 = vmatprep.subr.bf16.mxu0 0
  %1226 = vmatpush2.bf16.msra.mxu0 0
  %1227 = vmatprep.subr.bf16.mxu0 0
  %1228 = vmatpush2.bf16.msra.mxu0 0
  %1229 = vmatprep.subr.bf16.mxu0 0
  %1230 = vmatpush2.bf16.msra.mxu0 0
  %1231 = vmatprep.subr.bf16.mxu0 0
  %1232 = vmatpush2.bf16.msra.mxu0 0
  %1233 = vmatprep.subr.bf16.mxu0 0
  %1234 = vmatpush2.bf16.msra.mxu0 0
  %1235 = vmatprep.mubr.bf16.mxu0 0
  %1236 = vmatmul.mubr.bf16.gmra.mxu0 %v1201
  %v1237 = vpop.f32.mrf.mxu0
  %v1238 = vadd.f32 0.0, %v1237
  %v1239 = vpop.f32.mrf.mxu0
  %v1240 = vpop.f32.mrf.mxu0
  %v1241 = vpop.f32.mrf.mxu0
  %1242 = vdwg.mxu0
  %v1243 = vpack.c.bf16 %v1238, %v1238
  %v1245 = vsel %vm109, %v1243, 0
  %1247 = vmatprep.subr.bf16.mxu0 0
  %1248 = vmatpush1.bf16.msra.mxu0 0
  %1249 = vmatprep.subr.bf16.mxu0 0
  %1250 = vmatpush1.bf16.msra.mxu0 0
  %1251 = vmatprep.subr.bf16.mxu0 0
  %1252 = vmatpush1.bf16.msra.mxu0 0
  %1253 = vmatprep.subr.bf16.mxu0 0
  %1254 = vmatpush1.bf16.msra.mxu0 0
  %1255 = vmatprep.subr.bf16.mxu0 0
  %1256 = vmatpush1.bf16.msra.mxu0 0
  %1257 = vmatprep.subr.bf16.mxu0 0
  %1258 = vmatpush1.bf16.msra.mxu0 0
  %1259 = vmatprep.subr.bf16.mxu0 0
  %1260 = vmatpush1.bf16.msra.mxu0 %v882
  %1261 = vmatprep.subr.bf16.mxu0 0
  %1262 = vmatpush1.bf16.msra.mxu0 %v881
  %1263 = vmatprep.subr.bf16.mxu0 0
  %1264 = vmatpush2.bf16.msra.mxu0 0
  %1265 = vmatprep.subr.bf16.mxu0 0
  %1266 = vmatpush2.bf16.msra.mxu0 0
  %1267 = vmatprep.subr.bf16.mxu0 0
  %1268 = vmatpush2.bf16.msra.mxu0 0
  %1269 = vmatprep.subr.bf16.mxu0 0
  %1270 = vmatpush2.bf16.msra.mxu0 0
  %1271 = vmatprep.subr.bf16.mxu0 0
  %1272 = vmatpush2.bf16.msra.mxu0 0
  %1273 = vmatprep.subr.bf16.mxu0 0
  %1274 = vmatpush2.bf16.msra.mxu0 0
  %1275 = vmatprep.subr.bf16.mxu0 0
  %1276 = vmatpush2.bf16.msra.mxu0 0
  %1277 = vmatprep.subr.bf16.mxu0 0
  %1278 = vmatpush2.bf16.msra.mxu0 0
  %1279 = vmatprep.mubr.bf16.mxu0 0
  %1280 = vmatmul.mubr.bf16.gmra.mxu0 %v1245
  %v1281 = vpop.f32.mrf.mxu0
  %v1282 = vadd.f32 %v871, %v1281
  %v1283 = vpop.f32.mrf.mxu0
  %v1284 = vpop.f32.mrf.mxu0
  %v1285 = vpop.f32.mrf.mxu0
  %1286 = vdwg.mxu0
  %s1287 = scalar_lea.vmem %s21, 16
  %v1288 = vld [vmem:[%s1287] sm:$0xf]
  %v1289 = vld [vmem:[%s1287 + $0x4] sm:$0xf]
  %v1290 = vld [vmem:[%s1287 + $0x8] sm:$0xf]
  %v1291 = vld [vmem:[%s1287 + $0xc] sm:$0xf]
  %s1292 = scalar_lea.vmem %s22, 16
  %v1293 = vld [vmem:[%s1292] sm:$0xf]
  %v1294 = vld [vmem:[%s1292 + $0x4] sm:$0xf]
  %v1295 = vld [vmem:[%s1292 + $0x8] sm:$0xf]
  %v1296 = vld [vmem:[%s1292 + $0xc] sm:$0xf]
  %s1297 = scalar_lea.vmem %s23, 1
  %v1298 = vld [vmem:[%s1297] sm:$0x1]
  %s1299 = scalar_lea.vmem %s24, 1
  %v1300 = vld [vmem:[%s1299] sm:$0x1]
  %v1301 = vpack.c.bf16 %v1282, %v1282
  %v1303 = vlaneseq
  %v1304 = vshrl.u32 %v1303, 7
  %v1305 = vsub.s32 0, %v1304
  %v1306 = vrot.slane %v1298, %v1305
  %v1312 = vunpack.c.l.b16 %v1288
  %v1313 = vunpack.c.l.b16 %v1289
  %v1314 = vunpack.c.l.b16 %v1290
  %v1315 = vunpack.c.l.b16 %v1291
  %v1316 = vpack.c.b16 %v1313, %v1312
  %v1317 = vpack.c.b16 %v1315, %v1314
  %v1321 = vsel %vm109, %v1301, 0
  %1323 = vmatprep.subr.bf16.mxu0 0
  %1324 = vmatpush1.bf16.msra.mxu0 0
  %1325 = vmatprep.subr.bf16.mxu0 0
  %1326 = vmatpush1.bf16.msra.mxu0 0
  %1327 = vmatprep.subr.bf16.mxu0 0
  %1328 = vmatpush1.bf16.msra.mxu0 0
  %1329 = vmatprep.subr.bf16.mxu0 0
  %1330 = vmatpush1.bf16.msra.mxu0 0
  %1331 = vmatprep.subr.bf16.mxu0 0
  %1332 = vmatpush1.bf16.msra.mxu0 0
  %1333 = vmatprep.subr.bf16.mxu0 0
  %1334 = vmatpush1.bf16.msra.mxu0 0
  %1335 = vmatprep.subr.bf16.mxu0 0
  %1336 = vmatpush1.bf16.msra.mxu0 %v1317
  %1337 = vmatprep.subr.bf16.mxu0 0
  %1338 = vmatpush1.bf16.msra.mxu0 %v1316
  %1339 = vmatprep.subr.bf16.mxu0 0
  %1340 = vmatpush2.bf16.msra.mxu0 0
  %1341 = vmatprep.subr.bf16.mxu0 0
  %1342 = vmatpush2.bf16.msra.mxu0 0
  %1343 = vmatprep.subr.bf16.mxu0 0
  %1344 = vmatpush2.bf16.msra.mxu0 0
  %1345 = vmatprep.subr.bf16.mxu0 0
  %1346 = vmatpush2.bf16.msra.mxu0 0
  %1347 = vmatprep.subr.bf16.mxu0 0
  %1348 = vmatpush2.bf16.msra.mxu0 0
  %1349 = vmatprep.subr.bf16.mxu0 0
  %1350 = vmatpush2.bf16.msra.mxu0 0
  %1351 = vmatprep.subr.bf16.mxu0 0
  %1352 = vmatpush2.bf16.msra.mxu0 0
  %1353 = vmatprep.subr.bf16.mxu0 0
  %1354 = vmatpush2.bf16.msra.mxu0 0
  %1355 = vmatprep.mubr.bf16.mxu0 0
  %1356 = vmatmul.mubr.bf16.gmra.mxu0 %v1321
  %v1357 = vpop.f32.mrf.mxu0
  %v1358 = vadd.f32 %v1306, %v1357
  %v1359 = vpop.f32.mrf.mxu0
  %v1360 = vpop.f32.mrf.mxu0
  %v1361 = vpop.f32.mrf.mxu0
  %1362 = vdwg.mxu0
  %v1367 = vunpack.c.l.b16 %v1293
  %v1368 = vunpack.c.l.b16 %v1294
  %v1369 = vunpack.c.l.b16 %v1295
  %v1370 = vunpack.c.l.b16 %v1296
  %v1371 = vpack.c.b16 %v1368, %v1367
  %v1372 = vpack.c.b16 %v1370, %v1369
  %1375 = vmatprep.subr.bf16.mxu0 0
  %1376 = vmatpush1.bf16.msra.mxu0 0
  %1377 = vmatprep.subr.bf16.mxu0 0
  %1378 = vmatpush1.bf16.msra.mxu0 0
  %1379 = vmatprep.subr.bf16.mxu0 0
  %1380 = vmatpush1.bf16.msra.mxu0 0
  %1381 = vmatprep.subr.bf16.mxu0 0
  %1382 = vmatpush1.bf16.msra.mxu0 0
  %1383 = vmatprep.subr.bf16.mxu0 0
  %1384 = vmatpush1.bf16.msra.mxu0 0
  %1385 = vmatprep.subr.bf16.mxu0 0
  %1386 = vmatpush1.bf16.msra.mxu0 0
  %1387 = vmatprep.subr.bf16.mxu0 0
  %1388 = vmatpush1.bf16.msra.mxu0 %v1372
  %1389 = vmatprep.subr.bf16.mxu0 0
  %1390 = vmatpush1.bf16.msra.mxu0 %v1371
  %1391 = vmatprep.subr.bf16.mxu0 0
  %1392 = vmatpush2.bf16.msra.mxu0 0
  %1393 = vmatprep.subr.bf16.mxu0 0
  %1394 = vmatpush2.bf16.msra.mxu0 0
  %1395 = vmatprep.subr.bf16.mxu0 0
  %1396 = vmatpush2.bf16.msra.mxu0 0
  %1397 = vmatprep.subr.bf16.mxu0 0
  %1398 = vmatpush2.bf16.msra.mxu0 0
  %1399 = vmatprep.subr.bf16.mxu0 0
  %1400 = vmatpush2.bf16.msra.mxu0 0
  %1401 = vmatprep.subr.bf16.mxu0 0
  %1402 = vmatpush2.bf16.msra.mxu0 0
  %1403 = vmatprep.subr.bf16.mxu0 0
  %1404 = vmatpush2.bf16.msra.mxu0 0
  %1405 = vmatprep.subr.bf16.mxu0 0
  %1406 = vmatpush2.bf16.msra.mxu0 0
  %1407 = vmatprep.mubr.bf16.mxu0 0
  %1408 = vmatmul.mubr.bf16.gmra.mxu0 %v1102
  %v1409 = vpop.f32.mrf.mxu0
  %v1410 = vadd.f32 0.0, %v1409
  %v1411 = vpop.f32.mrf.mxu0
  %v1412 = vpop.f32.mrf.mxu0
  %v1413 = vpop.f32.mrf.mxu0
  %1414 = vdwg.mxu0
  %v1415 = vadd.f32 %v1358, %v1410
  %v1416 = vxor.u32 %v1415, 2147483648
  %v1417 = vmul.f32 %v1416, 1.442695
  %v1418 = vpow.pop %v1417
  %v1419 = vadd.f32 %v1418, 1.0
  %v1420 = vrcp.pop %v1419
  %v1421 = vmul.f32 1.0, %v1420
  %v1423 = vlaneseq
  %v1424 = vshrl.u32 %v1423, 7
  %v1425 = vsub.s32 0, %v1424
  %v1426 = vrot.slane %v1300, %v1425
  %1427 = vrot.lane.b32.xlu0 %v1426, 64
  %v1428 = vpop.permute.xlu0 %1427
  %v1430 = vadd.f32 %v1410, %v1428
  %1432 = vrot.lane.b32.xlu0 %v1430, 64
  %v1433 = vpop.permute.xlu0 %1432
  %v1435 = vmul.f32 %v1421, %v1433
  %1437 = vrot.lane.b32.xlu0 %v1435, 64
  %v1438 = vpop.permute.xlu0 %1437
  %v1440 = vadd.f32 %v1358, %v1438
  %v1441 = vtanh.pop %v1440
  %v1442 = vsub.f32 1.0, %v1421
  %1444 = vrot.lane.b32.xlu0 %v1441, 96
  %v1445 = vpop.permute.xlu0 %1444
  %v1447 = vmul.f32 %v1442, %v1445
  %v1448 = vmul.f32 %v1421, %v1090
  %v1449 = vadd.f32 %v1447, %v1448
  %1451 = vrot.lane.b32.xlu0 %v1449, 96
  %v1452 = vpop.permute.xlu0 %1451
  %1454 = vst.msk [vmem:[%s25 + $0x2] sm:$0x3] %vm1095, %v1452
  %v1455 = vpack.c.bf16 %v1449, %v1449
  %1457 = vrot.lane.b32.xlu0 %v1455, 96
  %v1458 = vpop.permute.xlu0 %1457
  %v1460 = vsel %vm109, %v1458, 0
  %1462 = vmatprep.subr.bf16.mxu0 0
  %1463 = vmatpush1.bf16.msra.mxu0 0
  %1464 = vmatprep.subr.bf16.mxu0 0
  %1465 = vmatpush1.bf16.msra.mxu0 0
  %1466 = vmatprep.subr.bf16.mxu0 0
  %1467 = vmatpush1.bf16.msra.mxu0 0
  %1468 = vmatprep.subr.bf16.mxu0 0
  %1469 = vmatpush1.bf16.msra.mxu0 0
  %1470 = vmatprep.subr.bf16.mxu0 0
  %1471 = vmatpush1.bf16.msra.mxu0 0
  %1472 = vmatprep.subr.bf16.mxu0 0
  %1473 = vmatpush1.bf16.msra.mxu0 0
  %1474 = vmatprep.subr.bf16.mxu0 0
  %1475 = vmatpush1.bf16.msra.mxu0 %v712
  %1476 = vmatprep.subr.bf16.mxu0 0
  %1477 = vmatpush1.bf16.msra.mxu0 %v711
  %1478 = vmatprep.subr.bf16.mxu0 0
  %1479 = vmatpush2.bf16.msra.mxu0 0
  %1480 = vmatprep.subr.bf16.mxu0 0
  %1481 = vmatpush2.bf16.msra.mxu0 0
  %1482 = vmatprep.subr.bf16.mxu0 0
  %1483 = vmatpush2.bf16.msra.mxu0 0
  %1484 = vmatprep.subr.bf16.mxu0 0
  %1485 = vmatpush2.bf16.msra.mxu0 0
  %1486 = vmatprep.subr.bf16.mxu0 0
  %1487 = vmatpush2.bf16.msra.mxu0 0
  %1488 = vmatprep.subr.bf16.mxu0 0
  %1489 = vmatpush2.bf16.msra.mxu0 0
  %1490 = vmatprep.subr.bf16.mxu0 0
  %1491 = vmatpush2.bf16.msra.mxu0 0
  %1492 = vmatprep.subr.bf16.mxu0 0
  %1493 = vmatpush2.bf16.msra.mxu0 0
  %1494 = vmatprep.mubr.bf16.mxu0 0
  %1495 = vmatmul.mubr.bf16.gmra.mxu0 %v1460
  %v1496 = vpop.f32.mrf.mxu0
  %v1497 = vadd.f32 %v701, %v1496
  %v1498 = vpop.f32.mrf.mxu0
  %v1499 = vpop.f32.mrf.mxu0
  %v1500 = vpop.f32.mrf.mxu0
  %1501 = vdwg.mxu0
  %v1502 = vpack.c.bf16 %v1497, %v1497
  %v1504 = vsel %vm109, %v1502, 0
  %1506 = vmatprep.subr.bf16.mxu0 0
  %1507 = vmatpush1.bf16.xpose.msra.mxu0 0
  %1508 = vmatprep.subr.bf16.mxu0 0
  %1509 = vmatpush1.bf16.xpose.msra.mxu0 0
  %1510 = vmatprep.subr.bf16.mxu0 0
  %1511 = vmatpush1.bf16.xpose.msra.mxu0 0
  %1512 = vmatprep.subr.bf16.mxu0 0
  %1513 = vmatpush1.bf16.xpose.msra.mxu0 0
  %1514 = vmatprep.subr.bf16.mxu0 0
  %1515 = vmatpush1.bf16.xpose.msra.mxu0 0
  %1516 = vmatprep.subr.bf16.mxu0 0
  %1517 = vmatpush1.bf16.xpose.msra.mxu0 0
  %1518 = vmatprep.subr.bf16.mxu0 0
  %1519 = vmatpush1.bf16.xpose.msra.mxu0 0
  %1520 = vmatprep.subr.bf16.mxu0 0
  %1521 = vmatpush1.bf16.xpose.msra.mxu0 %v763
  %1522 = vmatprep.subr.bf16.mxu0 0
  %1523 = vmatpush2.bf16.xpose.msra.mxu0 0
  %1524 = vmatprep.subr.bf16.mxu0 0
  %1525 = vmatpush2.bf16.xpose.msra.mxu0 0
  %1526 = vmatprep.subr.bf16.mxu0 0
  %1527 = vmatpush2.bf16.xpose.msra.mxu0 0
  %1528 = vmatprep.subr.bf16.mxu0 0
  %1529 = vmatpush2.bf16.xpose.msra.mxu0 0
  %1530 = vmatprep.subr.bf16.mxu0 0
  %1531 = vmatpush2.bf16.xpose.msra.mxu0 0
  %1532 = vmatprep.subr.bf16.mxu0 0
  %1533 = vmatpush2.bf16.xpose.msra.mxu0 0
  %1534 = vmatprep.subr.bf16.mxu0 0
  %1535 = vmatpush2.bf16.xpose.msra.mxu0 0
  %1536 = vmatprep.subr.bf16.mxu0 0
  %1537 = vmatpush2.bf16.xpose.msra.mxu0 0
  %1538 = vmatprep.mubr.bf16.mxu0 0
  %1539 = vmatmul.mubr.bf16.gmra.mxu0 %v1504
  %v1540 = vpop.f32.mrf.mxu0
  %v1541 = vadd.f32 %v694, %v1540
  %v1542 = vpop.f32.mrf.mxu0
  %v1543 = vpop.f32.mrf.mxu0
  %v1544 = vpop.f32.mrf.mxu0
  %1545 = vdwg.mxu0
  %v1546 = vsel %vm805, %v1541, -inf
  %1547 = vmax.xlane.f32.xlu0 %v1546
  %v1548 = vpop.xlane.xlu0 %1547
  %v1549 = vsub.f32 %v1541, %v1548
  %v1550 = vmul.f32 %v1549, 1.442695
  %v1551 = vpow.pop %v1550
  %v1552 = vsel %vm805, %v1551, 0.0
  %1553 = vadd.xlane.f32.xlu0 %v1552
  %v1554 = vpop.xlane.xlu0 %1553
  %v1555 = vrcp.pop %v1554
  %v1556 = vmul.f32 %v1551, %v1555
  %v1557 = vpack.c.bf16 %v1556, %v1556
  %v1559 = vsel %vm822, %v1557, 0
  %1561 = vmatprep.subr.bf16.mxu0 0
  %1562 = vmatpush1.bf16.msra.mxu0 0
  %1563 = vmatprep.subr.bf16.mxu0 0
  %1564 = vmatpush1.bf16.msra.mxu0 0
  %1565 = vmatprep.subr.bf16.mxu0 0
  %1566 = vmatpush1.bf16.msra.mxu0 0
  %1567 = vmatprep.subr.bf16.mxu0 0
  %1568 = vmatpush1.bf16.msra.mxu0 0
  %1569 = vmatprep.subr.bf16.mxu0 0
  %1570 = vmatpush1.bf16.msra.mxu0 0
  %1571 = vmatprep.subr.bf16.mxu0 0
  %1572 = vmatpush1.bf16.msra.mxu0 0
  %1573 = vmatprep.subr.bf16.mxu0 0
  %1574 = vmatpush1.bf16.msra.mxu0 0
  %1575 = vmatprep.subr.bf16.mxu0 0
  %1576 = vmatpush1.bf16.msra.mxu0 %v820
  %1577 = vmatprep.subr.bf16.mxu0 0
  %1578 = vmatpush2.bf16.msra.mxu0 0
  %1579 = vmatprep.subr.bf16.mxu0 0
  %1580 = vmatpush2.bf16.msra.mxu0 0
  %1581 = vmatprep.subr.bf16.mxu0 0
  %1582 = vmatpush2.bf16.msra.mxu0 0
  %1583 = vmatprep.subr.bf16.mxu0 0
  %1584 = vmatpush2.bf16.msra.mxu0 0
  %1585 = vmatprep.subr.bf16.mxu0 0
  %1586 = vmatpush2.bf16.msra.mxu0 0
  %1587 = vmatprep.subr.bf16.mxu0 0
  %1588 = vmatpush2.bf16.msra.mxu0 0
  %1589 = vmatprep.subr.bf16.mxu0 0
  %1590 = vmatpush2.bf16.msra.mxu0 0
  %1591 = vmatprep.subr.bf16.mxu0 0
  %1592 = vmatpush2.bf16.msra.mxu0 0
  %1593 = vmatprep.mubr.bf16.mxu0 0
  %1594 = vmatmul.mubr.bf16.gmra.mxu0 %v1559
  %v1595 = vpop.f32.mrf.mxu0
  %v1596 = vadd.f32 0.0, %v1595
  %v1597 = vpop.f32.mrf.mxu0
  %v1598 = vpop.f32.mrf.mxu0
  %v1599 = vpop.f32.mrf.mxu0
  %1600 = vdwg.mxu0
  %v1601 = vpack.c.bf16 %v1596, %v1596
  %v1603 = vsel %vm109, %v1601, 0
  %1605 = vmatprep.subr.bf16.mxu0 0
  %1606 = vmatpush1.bf16.msra.mxu0 0
  %1607 = vmatprep.subr.bf16.mxu0 0
  %1608 = vmatpush1.bf16.msra.mxu0 0
  %1609 = vmatprep.subr.bf16.mxu0 0
  %1610 = vmatpush1.bf16.msra.mxu0 0
  %1611 = vmatprep.subr.bf16.mxu0 0
  %1612 = vmatpush1.bf16.msra.mxu0 0
  %1613 = vmatprep.subr.bf16.mxu0 0
  %1614 = vmatpush1.bf16.msra.mxu0 0
  %1615 = vmatprep.subr.bf16.mxu0 0
  %1616 = vmatpush1.bf16.msra.mxu0 0
  %1617 = vmatprep.subr.bf16.mxu0 0
  %1618 = vmatpush1.bf16.msra.mxu0 %v882
  %1619 = vmatprep.subr.bf16.mxu0 0
  %1620 = vmatpush1.bf16.msra.mxu0 %v881
  %1621 = vmatprep.subr.bf16.mxu0 0
  %1622 = vmatpush2.bf16.msra.mxu0 0
  %1623 = vmatprep.subr.bf16.mxu0 0
  %1624 = vmatpush2.bf16.msra.mxu0 0
  %1625 = vmatprep.subr.bf16.mxu0 0
  %1626 = vmatpush2.bf16.msra.mxu0 0
  %1627 = vmatprep.subr.bf16.mxu0 0
  %1628 = vmatpush2.bf16.msra.mxu0 0
  %1629 = vmatprep.subr.bf16.mxu0 0
  %1630 = vmatpush2.bf16.msra.mxu0 0
  %1631 = vmatprep.subr.bf16.mxu0 0
  %1632 = vmatpush2.bf16.msra.mxu0 0
  %1633 = vmatprep.subr.bf16.mxu0 0
  %1634 = vmatpush2.bf16.msra.mxu0 0
  %1635 = vmatprep.subr.bf16.mxu0 0
  %1636 = vmatpush2.bf16.msra.mxu0 0
  %1637 = vmatprep.mubr.bf16.mxu0 0
  %1638 = vmatmul.mubr.bf16.gmra.mxu0 %v1603
  %v1639 = vpop.f32.mrf.mxu0
  %v1640 = vadd.f32 %v871, %v1639
  %v1641 = vpop.f32.mrf.mxu0
  %v1642 = vpop.f32.mrf.mxu0
  %v1643 = vpop.f32.mrf.mxu0
  %1644 = vdwg.mxu0
  %s1645 = scalar_lea.vmem %s21, 32
  %v1646 = vld [vmem:[%s1645] sm:$0xf]
  %v1647 = vld [vmem:[%s1645 + $0x4] sm:$0xf]
  %v1648 = vld [vmem:[%s1645 + $0x8] sm:$0xf]
  %v1649 = vld [vmem:[%s1645 + $0xc] sm:$0xf]
  %s1650 = scalar_lea.vmem %s22, 32
  %v1651 = vld [vmem:[%s1650] sm:$0xf]
  %v1652 = vld [vmem:[%s1650 + $0x4] sm:$0xf]
  %v1653 = vld [vmem:[%s1650 + $0x8] sm:$0xf]
  %v1654 = vld [vmem:[%s1650 + $0xc] sm:$0xf]
  %s1655 = scalar_lea.vmem %s23, 2
  %v1656 = vld [vmem:[%s1655] sm:$0x1]
  %s1657 = scalar_lea.vmem %s24, 2
  %v1658 = vld [vmem:[%s1657] sm:$0x1]
  %v1659 = vpack.c.bf16 %v1640, %v1640
  %v1661 = vlaneseq
  %v1662 = vshrl.u32 %v1661, 7
  %v1663 = vsub.s32 0, %v1662
  %v1664 = vrot.slane %v1656, %v1663
  %v1670 = vunpack.c.l.b16 %v1646
  %v1671 = vunpack.c.l.b16 %v1647
  %v1672 = vunpack.c.l.b16 %v1648
  %v1673 = vunpack.c.l.b16 %v1649
  %v1674 = vpack.c.b16 %v1671, %v1670
  %v1675 = vpack.c.b16 %v1673, %v1672
  %v1679 = vsel %vm109, %v1659, 0
  %1681 = vmatprep.subr.bf16.mxu0 0
  %1682 = vmatpush1.bf16.msra.mxu0 0
  %1683 = vmatprep.subr.bf16.mxu0 0
  %1684 = vmatpush1.bf16.msra.mxu0 0
  %1685 = vmatprep.subr.bf16.mxu0 0
  %1686 = vmatpush1.bf16.msra.mxu0 0
  %1687 = vmatprep.subr.bf16.mxu0 0
  %1688 = vmatpush1.bf16.msra.mxu0 0
  %1689 = vmatprep.subr.bf16.mxu0 0
  %1690 = vmatpush1.bf16.msra.mxu0 0
  %1691 = vmatprep.subr.bf16.mxu0 0
  %1692 = vmatpush1.bf16.msra.mxu0 0
  %1693 = vmatprep.subr.bf16.mxu0 0
  %1694 = vmatpush1.bf16.msra.mxu0 %v1675
  %1695 = vmatprep.subr.bf16.mxu0 0
  %1696 = vmatpush1.bf16.msra.mxu0 %v1674
  %1697 = vmatprep.subr.bf16.mxu0 0
  %1698 = vmatpush2.bf16.msra.mxu0 0
  %1699 = vmatprep.subr.bf16.mxu0 0
  %1700 = vmatpush2.bf16.msra.mxu0 0
  %1701 = vmatprep.subr.bf16.mxu0 0
  %1702 = vmatpush2.bf16.msra.mxu0 0
  %1703 = vmatprep.subr.bf16.mxu0 0
  %1704 = vmatpush2.bf16.msra.mxu0 0
  %1705 = vmatprep.subr.bf16.mxu0 0
  %1706 = vmatpush2.bf16.msra.mxu0 0
  %1707 = vmatprep.subr.bf16.mxu0 0
  %1708 = vmatpush2.bf16.msra.mxu0 0
  %1709 = vmatprep.subr.bf16.mxu0 0
  %1710 = vmatpush2.bf16.msra.mxu0 0
  %1711 = vmatprep.subr.bf16.mxu0 0
  %1712 = vmatpush2.bf16.msra.mxu0 0
  %1713 = vmatprep.mubr.bf16.mxu0 0
  %1714 = vmatmul.mubr.bf16.gmra.mxu0 %v1679
  %v1715 = vpop.f32.mrf.mxu0
  %v1716 = vadd.f32 %v1664, %v1715
  %v1717 = vpop.f32.mrf.mxu0
  %v1718 = vpop.f32.mrf.mxu0
  %v1719 = vpop.f32.mrf.mxu0
  %1720 = vdwg.mxu0
  %v1725 = vunpack.c.l.b16 %v1651
  %v1726 = vunpack.c.l.b16 %v1652
  %v1727 = vunpack.c.l.b16 %v1653
  %v1728 = vunpack.c.l.b16 %v1654
  %v1729 = vpack.c.b16 %v1726, %v1725
  %v1730 = vpack.c.b16 %v1728, %v1727
  %1733 = vmatprep.subr.bf16.mxu0 0
  %1734 = vmatpush1.bf16.msra.mxu0 0
  %1735 = vmatprep.subr.bf16.mxu0 0
  %1736 = vmatpush1.bf16.msra.mxu0 0
  %1737 = vmatprep.subr.bf16.mxu0 0
  %1738 = vmatpush1.bf16.msra.mxu0 0
  %1739 = vmatprep.subr.bf16.mxu0 0
  %1740 = vmatpush1.bf16.msra.mxu0 0
  %1741 = vmatprep.subr.bf16.mxu0 0
  %1742 = vmatpush1.bf16.msra.mxu0 0
  %1743 = vmatprep.subr.bf16.mxu0 0
  %1744 = vmatpush1.bf16.msra.mxu0 0
  %1745 = vmatprep.subr.bf16.mxu0 0
  %1746 = vmatpush1.bf16.msra.mxu0 %v1730
  %1747 = vmatprep.subr.bf16.mxu0 0
  %1748 = vmatpush1.bf16.msra.mxu0 %v1729
  %1749 = vmatprep.subr.bf16.mxu0 0
  %1750 = vmatpush2.bf16.msra.mxu0 0
  %1751 = vmatprep.subr.bf16.mxu0 0
  %1752 = vmatpush2.bf16.msra.mxu0 0
  %1753 = vmatprep.subr.bf16.mxu0 0
  %1754 = vmatpush2.bf16.msra.mxu0 0
  %1755 = vmatprep.subr.bf16.mxu0 0
  %1756 = vmatpush2.bf16.msra.mxu0 0
  %1757 = vmatprep.subr.bf16.mxu0 0
  %1758 = vmatpush2.bf16.msra.mxu0 0
  %1759 = vmatprep.subr.bf16.mxu0 0
  %1760 = vmatpush2.bf16.msra.mxu0 0
  %1761 = vmatprep.subr.bf16.mxu0 0
  %1762 = vmatpush2.bf16.msra.mxu0 0
  %1763 = vmatprep.subr.bf16.mxu0 0
  %1764 = vmatpush2.bf16.msra.mxu0 0
  %1765 = vmatprep.mubr.bf16.mxu0 0
  %1766 = vmatmul.mubr.bf16.gmra.mxu0 %v1460
  %v1767 = vpop.f32.mrf.mxu0
  %v1768 = vadd.f32 0.0, %v1767
  %v1769 = vpop.f32.mrf.mxu0
  %v1770 = vpop.f32.mrf.mxu0
  %v1771 = vpop.f32.mrf.mxu0
  %1772 = vdwg.mxu0
  %v1773 = vadd.f32 %v1716, %v1768
  %v1774 = vxor.u32 %v1773, 2147483648
  %v1775 = vmul.f32 %v1774, 1.442695
  %v1776 = vpow.pop %v1775
  %v1777 = vadd.f32 %v1776, 1.0
  %v1778 = vrcp.pop %v1777
  %v1779 = vmul.f32 1.0, %v1778
  %v1781 = vlaneseq
  %v1782 = vshrl.u32 %v1781, 7
  %v1783 = vsub.s32 0, %v1782
  %v1784 = vrot.slane %v1658, %v1783
  %1785 = vrot.lane.b32.xlu0 %v1784, 64
  %v1786 = vpop.permute.xlu0 %1785
  %v1788 = vadd.f32 %v1768, %v1786
  %1790 = vrot.lane.b32.xlu0 %v1788, 64
  %v1791 = vpop.permute.xlu0 %1790
  %v1793 = vmul.f32 %v1779, %v1791
  %1795 = vrot.lane.b32.xlu0 %v1793, 64
  %v1796 = vpop.permute.xlu0 %1795
  %v1798 = vadd.f32 %v1716, %v1796
  %v1799 = vtanh.pop %v1798
  %v1800 = vsub.f32 1.0, %v1779
  %1802 = vrot.lane.b32.xlu0 %v1799, 96
  %v1803 = vpop.permute.xlu0 %1802
  %v1805 = vmul.f32 %v1800, %v1803
  %v1806 = vmul.f32 %v1779, %v1449
  %v1807 = vadd.f32 %v1805, %v1806
  %1809 = vrot.lane.b32.xlu0 %v1807, 96
  %v1810 = vpop.permute.xlu0 %1809
  %1812 = vst.msk [vmem:[%s25 + $0x4] sm:$0x3] %vm1095, %v1810
  // Predicated region
  $region102: #{ra_decoder_forward_pallas.1} parent=0 // pred_check
    _
  $region103: #{ra_decoder_forward_pallas.1} parent=0 // pred_check_branch
    %1814 = sbr.rel (0) target = $region105
  $region104: #{ra_decoder_forward_pallas.1} parent=0 // pred_region
    _
  $region105: #{ra_decoder_forward_pallas.1} parent=0 // pred_fallthru
    _
  // Predicated region
  $region106: #{ra_decoder_forward_pallas.1} parent=0 // pred_check
    _
  $region107: #{ra_decoder_forward_pallas.1} parent=0 // pred_check_branch
    %1816 = sbr.rel (0) target = $region109
  $region108: #{ra_decoder_forward_pallas.1} parent=0 // pred_region
    _
  $region109: #{ra_decoder_forward_pallas.1} parent=0 // pred_fallthru
    _

</llo_original>
